<compile_context>
chip_gen: v6e
topology: v6e:2x2x1
jax: 0.10.0
libtpu: 0.0.40
codegen_flags: <defaults>
</compile_context>

<pallas_src>
import functools

import jax
import jax.numpy as jnp
from jax.experimental import pallas as pl
from jax.experimental.pallas import tpu as pltpu


def _bn_kernel(x_ref, gamma_ref, beta_ref, seg_ref, segt_ref, o_ref, *,
               eps, inv_n, k):
    """One grid step normalizes g_blk channel-groups (k channels per group).

    x_ref     : (bs, g_blk, K)  with K = k*step   (lane-dense last dim)
    gamma/beta: (g_blk, k)
    seg_ref   : (K, k)  0/1 segment matrix, seg[p, j] = (p // step == j)
    segt_ref  : (k, K)  its transpose
    o_ref     : (bs, g_blk, K)
    """
    xf = x_ref[...].astype(jnp.float32)            # (bs, g_blk, K)

    # One-pass batch statistics (f32 accumulation): reduce over batch first...
    s1 = jnp.sum(xf, axis=0)                       # (g_blk, K)
    s2 = jnp.sum(xf * xf, axis=0)                  # (g_blk, K)

    if k == 1:
        # ... each group is a single channel: plain lane reductions.
        ch_sum = jnp.sum(s1, axis=1, keepdims=True)   # (g_blk, 1)
        ch_sq = jnp.sum(s2, axis=1, keepdims=True)    # (g_blk, 1)
    else:
        # ... then per-channel segment sums over the step-sized lane runs via
        # a tiny constant 0/1 matrix on the (otherwise idle) MXU.
        seg = seg_ref[...]
        ch_sum = jnp.dot(s1, seg, preferred_element_type=jnp.float32)  # (g_blk, k)
        ch_sq = jnp.dot(s2, seg, preferred_element_type=jnp.float32)   # (g_blk, k)

    mean = ch_sum * inv_n
    var = jnp.maximum(ch_sq * inv_n - mean * mean, 0.0)
    scale = gamma_ref[...].astype(jnp.float32) * jax.lax.rsqrt(var + eps)
    shift = beta_ref[...].astype(jnp.float32) - mean * scale

    if k == 1:
        scale_row = scale                          # (g_blk, 1): broadcasts over lanes
        shift_row = shift
    else:
        segt = segt_ref[...]
        scale_row = jnp.dot(scale, segt, preferred_element_type=jnp.float32)  # (g_blk, K)
        shift_row = jnp.dot(shift, segt, preferred_element_type=jnp.float32)

    y = xf * scale_row + shift_row                 # broadcast over the batch axis
    o_ref[...] = y.astype(o_ref.dtype)


def _vmem_budget():
    """(per-step block budget, vmem_limit) derived from device VMEM capacity."""
    cap = None
    try:
        cap = getattr(pltpu.get_tpu_info(), "vmem_capacity_bytes", None)
    except Exception:
        cap = None
    if not cap:
        cap = 128 * 1024 * 1024
    block_budget = max(1 << 20, cap // 8)                  # 16 MiB (v5e/v6e) / 8 MiB (v7x)
    vmem_limit = int(min(cap // 2, 64 * 1024 * 1024))      # 64 MiB / 32 MiB
    return block_budget, vmem_limit


def _choose_group_block(G, bs, K, k, io_itemsize, budget_bytes):
    """Largest group-block honoring the (8,128) rule, VMEM budget (incl. f32
    temporaries and constant segment matrices), preferring >=4 grid steps when
    blocks can stay >= ~1 MiB."""
    fixed = 4 * K * k * 4 + (1 << 15)              # seg + seg.T (double-buffered) + slack

    def blk_bytes(d):
        io = 2 * 2 * bs * d * K * io_itemsize      # double-buffered in + out blocks
        f32_tmp = (2 * bs + 2) * d * K * 4         # xf, y, scale_row/shift_row in f32
        params = 4 * d * k * 4                     # gamma/beta blocks (2 inputs x 2 bufs)
        return io + f32_tmp + params + fixed

    cands = sorted(d for d in range(1, G + 1) if G % d == 0 and (d % 8 == 0 or d == G))
    fitting = [d for d in cands if blk_bytes(d) <= budget_bytes]
    if not fitting:
        # TODO(synk): for shapes where even the smallest legal block exceeds VMEM
        # (huge bs*step with an un-tileable C), a two-pass sum/sumsq + normalize
        # kernel would bound VMEM at the cost of re-reading x.
        return cands[0]
    best = max(fitting)
    preferred = [d for d in fitting
                 if G // d >= 4 and 2 * bs * d * K * io_itemsize >= (1 << 20)]
    if preferred:
        best = max(preferred)
    return best


def norm_data_forward(x, gamma, beta, *, eps=1e-5, max_block_bytes=None):
    """x: [bs, c, num_joints, step]; gamma/beta: [c*num_joints] (BatchNorm1d affine)."""
    bs, c, num_joints, step = x.shape
    C = c * num_joints
    assert gamma.shape == (C,) and beta.shape == (C,)

    # Smallest divisor k of C such that K = k*step is a multiple of 128 (lane
    # dense); fall back to one group per batch row (K = C*step == full dim).
    k = next((d for d in range(1, C + 1) if C % d == 0 and (d * step) % 128 == 0), C)
    G = C // k
    K = k * step

    # Free, contiguous views (no HBM transpose passes).
    x3 = x.reshape(bs, G, K)
    g2 = gamma.reshape(G, k).astype(jnp.float32)
    b2 = beta.reshape(G, k).astype(jnp.float32)

    # Constant segment matrices: channel j of a group owns lanes [j*step,(j+1)*step).
    seg = (jnp.arange(K, dtype=jnp.int32)[:, None] // step
           == jnp.arange(k, dtype=jnp.int32)[None, :]).astype(jnp.float32)   # (K, k)
    segt = jnp.transpose(seg)                                                # (k, K)

    io_itemsize = jnp.dtype(x.dtype).itemsize
    budget, vmem_limit = _vmem_budget()
    if max_block_bytes is not None:
        budget = max_block_bytes
    g_blk = _choose_group_block(G, bs, K, k, io_itemsize, budget)
    grid = (G // g_blk,)

    kernel = functools.partial(_bn_kernel, eps=float(eps),
                               inv_n=1.0 / float(bs * step), k=k)

    nelem = bs * C * step
    cost = pl.CostEstimate(flops=8 * nelem, transcendentals=C,
                           bytes_accessed=2 * nelem * io_itemsize)

    out = pl.pallas_call(
        kernel,
        out_shape=jax.ShapeDtypeStruct((bs, G, K), x.dtype),
        grid_spec=pltpu.PrefetchScalarGridSpec(
            num_scalar_prefetch=0,
            grid=grid,
            in_specs=[
                pl.BlockSpec((bs, g_blk, K), lambda i: (0, i, 0)),
                pl.BlockSpec((g_blk, k), lambda i: (i, 0)),
                pl.BlockSpec((g_blk, k), lambda i: (i, 0)),
                pl.BlockSpec((K, k), lambda i: (0, 0)),   # constant block -> stays resident
                pl.BlockSpec((k, K), lambda i: (0, 0)),
            ],
            out_specs=pl.BlockSpec((bs, g_blk, K), lambda i: (0, i, 0)),
        ),
        compiler_params=pltpu.CompilerParams(
            dimension_semantics=("parallel",),
            vmem_limit_bytes=vmem_limit,
        ),
        cost_estimate=cost,
    )(x3, g2, b2, seg, segt)

    # TODO(synk): BatchNorm1d running_mean/running_var buffer updates (module
    # training-time state) are not modeled; only the forward output is computed.
    return out.reshape(bs, c, num_joints, step)


def _reference(x, gamma, beta, eps=1e-5):
    # pure-JAX mirror of the PyTorch forward (training-mode BN, biased variance)
    bs, c, J, step = x.shape
    xf = x.reshape(bs, c * J, step).astype(jnp.float32)
    mean = jnp.mean(xf, axis=(0, 2), keepdims=True)
    var = jnp.mean((xf - mean) ** 2, axis=(0, 2), keepdims=True)
    y = (xf - mean) * jax.lax.rsqrt(var + eps)
    y = y * gamma.reshape(1, -1, 1) + beta.reshape(1, -1, 1)
    return y.reshape(bs, c, J, step).astype(x.dtype)


if __name__ == "__main__":
    root = jax.random.PRNGKey(0)

    def run_case(bs, dim, J, step, salt, **kw):
        C = dim * J
        k1, k2, k3 = jax.random.split(jax.random.fold_in(root, salt), 3)
        x = jax.random.normal(k1, (bs, dim, J, step), dtype=jnp.float32)
        gamma = 1.0 + 0.1 * jax.random.normal(k2, (C,), dtype=jnp.float32)
        beta = 0.1 * jax.random.normal(k3, (C,), dtype=jnp.float32)
        out = jax.block_until_ready(norm_data_forward(x, gamma, beta, **kw))
        ref = _reference(x, gamma, beta)
        assert out.shape == x.shape, out.shape
        assert jnp.allclose(out, ref, atol=1e-4, rtol=1e-4), "mismatch vs reference"

    # dim=4 (C=100 has no multiple-of-8 divisor): exercises the whole-row
    # fallback (G=1, 1600-wide lane-dense rows).
    run_case(2, 4, 25, 16, salt=1)

    # module-default dim=64 (C=1600): k=8 -> 128-lane dense blocks, G=200.
    run_case(2, 64, 25, 16, salt=2)

    # same shape with a tight budget: forces the multi-step channel-group grid
    # (g_blk=8, grid=(25,)) to exercise pipelining / "parallel" semantics.
    run_case(2, 64, 25, 16, salt=3, max_block_bytes=192 * 1024)

    print("KERNEL_OK")
</pallas_src>

<mosaic_0001>
module attributes {stable_mosaic.version = 11 : i64} {
  func.func @_bn_kernel(%arg0: i32, %arg1: memref<2x1x1600xf32, #tpu.memory_space<vmem>>, %arg2: memref<1x100xf32, #tpu.memory_space<vmem>>, %arg3: memref<1x100xf32, #tpu.memory_space<vmem>>, %arg4: memref<1600x100xf32, #tpu.memory_space<vmem>>, %arg5: memref<100x1600xf32, #tpu.memory_space<vmem>>, %arg6: memref<2x1x1600xf32, #tpu.memory_space<vmem>>) attributes {dimension_semantics = [#tpu.dimension_semantics<parallel>], iteration_bounds = array<i64: 1>, scalar_prefetch = 0 : i64, scratch_operands = 0 : i64, tpu.core_type = #tpu.core_type<tc>, window_params = [{transform_indices = @transform_0, window_bounds = array<i64: 2, 1, 1600>}, {transform_indices = @transform_1, window_bounds = array<i64: 1, 100>}, {transform_indices = @transform_2, window_bounds = array<i64: 1, 100>}, {pipeline_mode = #tpu.pipeline_mode<synchronous>, transform_indices = @transform_3, window_bounds = array<i64: 1600, 100>}, {pipeline_mode = #tpu.pipeline_mode<synchronous>, transform_indices = @transform_4, window_bounds = array<i64: 100, 1600>}, {transform_indices = @transform_5, window_bounds = array<i64: 2, 1, 1600>}]} {
    %c0 = arith.constant 0 : index
    %c0_0 = arith.constant 0 : index
    %c0_1 = arith.constant 0 : index
    %0 = vector.load %arg1[%c0, %c0_0, %c0_1] : memref<2x1x1600xf32, #tpu.memory_space<vmem>>, vector<2x1x1600xf32>
    %cst = arith.constant dense<0.000000e+00> : vector<1x1600xf32>
    %1 = vector.multi_reduction <add>, %0, %cst [0] : vector<2x1x1600xf32> to vector<1x1600xf32>
    %2 = arith.mulf %0, %0 : vector<2x1x1600xf32>
    %cst_2 = arith.constant dense<0.000000e+00> : vector<1x1600xf32>
    %3 = vector.multi_reduction <add>, %2, %cst_2 [0] : vector<2x1x1600xf32> to vector<1x1600xf32>
    %c0_3 = arith.constant 0 : index
    %c0_4 = arith.constant 0 : index
    %4 = vector.load %arg4[%c0_3, %c0_4] : memref<1600x100xf32, #tpu.memory_space<vmem>>, vector<1600x100xf32>
    %cst_5 = arith.constant dense<0.000000e+00> : vector<1x100xf32>
    %5 = tpu.matmul %1, %4, %cst_5 {dimension_numbers = #tpu.dot_dimension_numbers<[1], [0], [0], [1], [0, 0, 1, 1], [], []>} : vector<1x1600xf32>, vector<1600x100xf32>, vector<1x100xf32> -> vector<1x100xf32>
    %cst_6 = arith.constant dense<0.000000e+00> : vector<1x100xf32>
    %6 = tpu.matmul %3, %4, %cst_6 {dimension_numbers = #tpu.dot_dimension_numbers<[1], [0], [0], [1], [0, 0, 1, 1], [], []>} : vector<1x1600xf32>, vector<1600x100xf32>, vector<1x100xf32> -> vector<1x100xf32>
    %cst_7 = arith.constant 3.125000e-02 : f32
    %7 = vector.broadcast %cst_7 : f32 to vector<1x100xf32>
    %8 = arith.mulf %5, %7 : vector<1x100xf32>
    %cst_8 = arith.constant 3.125000e-02 : f32
    %9 = vector.broadcast %cst_8 : f32 to vector<1x100xf32>
    %10 = arith.mulf %6, %9 : vector<1x100xf32>
    %11 = arith.mulf %8, %8 : vector<1x100xf32>
    %12 = arith.subf %10, %11 : vector<1x100xf32>
    %cst_9 = arith.constant 0.000000e+00 : f32
    %13 = vector.broadcast %cst_9 : f32 to vector<1x100xf32>
    %14 = arith.maximumf %12, %13 : vector<1x100xf32>
    %c0_10 = arith.constant 0 : index
    %c0_11 = arith.constant 0 : index
    %15 = vector.load %arg2[%c0_10, %c0_11] : memref<1x100xf32, #tpu.memory_space<vmem>>, vector<1x100xf32>
    %cst_12 = arith.constant 9.99999974E-6 : f32
    %16 = vector.broadcast %cst_12 : f32 to vector<1x100xf32>
    %17 = arith.addf %14, %16 : vector<1x100xf32>
    %18 = math.rsqrt %17 : vector<1x100xf32>
    %19 = arith.mulf %15, %18 : vector<1x100xf32>
    %c0_13 = arith.constant 0 : index
    %c0_14 = arith.constant 0 : index
    %20 = vector.load %arg3[%c0_13, %c0_14] : memref<1x100xf32, #tpu.memory_space<vmem>>, vector<1x100xf32>
    %21 = arith.mulf %8, %19 : vector<1x100xf32>
    %22 = arith.subf %20, %21 : vector<1x100xf32>
    %c0_15 = arith.constant 0 : index
    %c0_16 = arith.constant 0 : index
    %23 = vector.load %arg5[%c0_15, %c0_16] : memref<100x1600xf32, #tpu.memory_space<vmem>>, vector<100x1600xf32>
    %cst_17 = arith.constant dense<0.000000e+00> : vector<1x1600xf32>
    %24 = tpu.matmul %19, %23, %cst_17 {dimension_numbers = #tpu.dot_dimension_numbers<[1], [0], [0], [1], [0, 0, 1, 1], [], []>} : vector<1x100xf32>, vector<100x1600xf32>, vector<1x1600xf32> -> vector<1x1600xf32>
    %cst_18 = arith.constant dense<0.000000e+00> : vector<1x1600xf32>
    %25 = tpu.matmul %22, %23, %cst_18 {dimension_numbers = #tpu.dot_dimension_numbers<[1], [0], [0], [1], [0, 0, 1, 1], [], []>} : vector<1x100xf32>, vector<100x1600xf32>, vector<1x1600xf32> -> vector<1x1600xf32>
    %26 = vector.shape_cast %24 : vector<1x1600xf32> to vector<1x1x1600xf32>
    %27 = vector.broadcast %26 : vector<1x1x1600xf32> to vector<2x1x1600xf32>
    %28 = arith.mulf %0, %27 : vector<2x1x1600xf32>
    %29 = vector.shape_cast %25 : vector<1x1600xf32> to vector<1x1x1600xf32>
    %30 = vector.broadcast %29 : vector<1x1x1600xf32> to vector<2x1x1600xf32>
    %31 = arith.addf %28, %30 : vector<2x1x1600xf32>
    %c0_19 = arith.constant 0 : index
    %c0_20 = arith.constant 0 : index
    %c0_21 = arith.constant 0 : index
    %32 = vector.load %arg6[%c0_19, %c0_20, %c0_21] : memref<2x1x1600xf32, #tpu.memory_space<vmem>>, vector<2x1x1600xf32>
    tpu.vector_store %arg6[%c0_19, %c0_20, %c0_21], %31 {strides = array<i32>} : memref<2x1x1600xf32, #tpu.memory_space<vmem>>, vector<2x1x1600xf32>,
    return
  }
  func.func @transform_0(%arg0: i32) -> (i32, i32, i32) {
    %c0_i32 = arith.constant 0 : i32
    %c0_i32_0 = arith.constant 0 : i32
    %c0_i32_1 = arith.constant 0 : i32
    return %c0_i32, %arg0, %c0_i32_0 : i32, i32, i32
  }
  func.func @transform_1(%arg0: i32) -> (i32, i32) {
    %c0_i32 = arith.constant 0 : i32
    %c0_i32_0 = arith.constant 0 : i32
    return %arg0, %c0_i32 : i32, i32
  }
  func.func @transform_2(%arg0: i32) -> (i32, i32) {
    %c0_i32 = arith.constant 0 : i32
    %c0_i32_0 = arith.constant 0 : i32
    return %arg0, %c0_i32 : i32, i32
  }
  func.func @transform_3(%arg0: i32) -> (i32, i32) {
    %c0_i32 = arith.constant 0 : i32
    %c0_i32_0 = arith.constant 0 : i32
    %c0_i32_1 = arith.constant 0 : i32
    return %c0_i32, %c0_i32_0 : i32, i32
  }
  func.func @transform_4(%arg0: i32) -> (i32, i32) {
    %c0_i32 = arith.constant 0 : i32
    %c0_i32_0 = arith.constant 0 : i32
    %c0_i32_1 = arith.constant 0 : i32
    return %c0_i32, %c0_i32_0 : i32, i32
  }
  func.func @transform_5(%arg0: i32) -> (i32, i32, i32) {
    %c0_i32 = arith.constant 0 : i32
    %c0_i32_0 = arith.constant 0 : i32
    %c0_i32_1 = arith.constant 0 : i32
    return %c0_i32, %arg0, %c0_i32_0 : i32, i32, i32
  }
}

</mosaic_0001>

<llo_original>
// kernel: tpu_custom_call.1
$region0: #{tpu_custom_call.1}
  #allocation0 [shape = 'u32[]', space=smem, size = 0x4, offset = 0x4, fixed_abs, tag = 'smem constant byte address 0x4 - core index']
  #allocation1 [shape = 'u32[144,128]{1,0:T(1,128)}', space=vmem, size = 0x12000, scoped, tag = 'internal scratch']
  %s0 = inlined_call_operand.vmem [shape: f32[2,1,1600], index: 0, kind: input, shape index: {}]
  %s1 = inlined_call_operand.vmem [shape: f32[1,100], index: 1, kind: input, shape index: {}]
  %s2 = inlined_call_operand.vmem [shape: f32[1,100], index: 2, kind: input, shape index: {}]
  %s3 = inlined_call_operand.vmem [shape: f32[1600,100], index: 3, kind: input, shape index: {}]
  %s4 = inlined_call_operand.vmem [shape: f32[100,1600], index: 4, kind: input, shape index: {}]
  %s5 = inlined_call_operand.hbm [shape: f32[2,1,1600], index: 5, kind: output, shape index: {}]
  %s6 = sld [smem:[#allocation0]]
  $region30: #{tpu_custom_call.1} parent=0
    _
  %s8 = ssub.s32 1, %s6
  %s9 = scalar_select 0, %s8, %s6
  $region1: #{tpu_custom_call.1} parent=0
    #allocation2 [shape = 'u8[13312]{0}', space=vmem, size = 0x3400, scoped, tag = 'output window, operand 0, single buffered']
    #allocation3 [shape = 's32[1]{0}', space=sflag, size = 0x4, scoped, tag = 'scoped memory for tpu_custom_call.1']
    %10 = vsyncpa [#allocation3], 0
    // Predicated region
    $region2: #{tpu_custom_call.1} parent=1 // pred_check
      _
    $region3: #{tpu_custom_call.1} parent=1 // pred_check_branch
      %12 = sbr.rel (0) target = $region5
    $region4: #{tpu_custom_call.1} parent=1 // pred_region
      _
    $region5: #{tpu_custom_call.1} parent=1 // pred_fallthru
      _
    // Predicated region
    $region6: #{tpu_custom_call.1} parent=1 // pred_check
      _
    $region7: #{tpu_custom_call.1} parent=1 // pred_check_branch
      %14 = sbr.rel (0) target = $region9
    $region8: #{tpu_custom_call.1} parent=1 // pred_region
      _
    $region9: #{tpu_custom_call.1} parent=1 // pred_fallthru
      _
    // Predicated region
    $region10: #{tpu_custom_call.1} parent=1 // pred_check
      _
    $region11: #{tpu_custom_call.1} parent=1 // pred_check_branch
      %16 = sbr.rel (0) target = $region13
    $region12: #{tpu_custom_call.1} parent=1 // pred_region
      _
    $region13: #{tpu_custom_call.1} parent=1 // pred_fallthru
      _
    // Predicated region
    $region14: #{tpu_custom_call.1} parent=1 // pred_check
      _
    $region15: #{tpu_custom_call.1} parent=1 // pred_check_branch
      %18 = sbr.rel (0) target = $region17
    $region16: #{tpu_custom_call.1} parent=1 // pred_region
      _
    $region17: #{tpu_custom_call.1} parent=1 // pred_fallthru
      _
    // Predicated region
    $region18: #{tpu_custom_call.1} parent=1 // pred_check
      _
    $region19: #{tpu_custom_call.1} parent=1 // pred_check_branch
      %20 = sbr.rel (0) target = $region21
    $region20: #{tpu_custom_call.1} parent=1 // pred_region
      _
    $region21: #{tpu_custom_call.1} parent=1 // pred_fallthru
      _
    %v21 = vld [vmem:[%s0] sm:$0xff]
    %v22 = vld [vmem:[%s0 + $0x8] sm:$0x1f]
    %v23 = vld [vmem:[%s0 + $0xd] sm:$0xff]
    %v24 = vld [vmem:[%s0 + $0x15] sm:$0x1f]
    %v29 = vlaneseq
    %v30 = vshrl.u32 %v29, 7
    %v31 = vsub.s32 0, %v30
    %v32 = vrot.slane %v21, %v31
    %v33 = vlaneseq
    %v34 = vshrl.u32 %v33, 7
    %v35 = vsub.s32 1, %v34
    %v36 = vrot.slane %v21, %v35
    %v37 = vlaneseq
    %v38 = vshrl.u32 %v37, 7
    %v39 = vsub.s32 2, %v38
    %v40 = vrot.slane %v21, %v39
    %v41 = vlaneseq
    %v42 = vshrl.u32 %v41, 7
    %v43 = vsub.s32 3, %v42
    %v44 = vrot.slane %v21, %v43
    %v45 = vlaneseq
    %v46 = vshrl.u32 %v45, 7
    %v47 = vsub.s32 4, %v46
    %v48 = vrot.slane %v21, %v47
    %v49 = vlaneseq
    %v50 = vshrl.u32 %v49, 7
    %v51 = vsub.s32 5, %v50
    %v52 = vrot.slane %v21, %v51
    %v53 = vlaneseq
    %v54 = vshrl.u32 %v53, 7
    %v55 = vsub.s32 6, %v54
    %v56 = vrot.slane %v21, %v55
    %v57 = vlaneseq
    %v58 = vshrl.u32 %v57, 7
    %v59 = vsub.s32 7, %v58
    %v60 = vrot.slane %v21, %v59
    %v61 = vlaneseq
    %v62 = vshrl.u32 %v61, 7
    %v63 = vsub.s32 0, %v62
    %v64 = vrot.slane %v22, %v63
    %v65 = vlaneseq
    %v66 = vshrl.u32 %v65, 7
    %v67 = vsub.s32 1, %v66
    %v68 = vrot.slane %v22, %v67
    %v69 = vlaneseq
    %v70 = vshrl.u32 %v69, 7
    %v71 = vsub.s32 2, %v70
    %v72 = vrot.slane %v22, %v71
    %v73 = vlaneseq
    %v74 = vshrl.u32 %v73, 7
    %v75 = vsub.s32 3, %v74
    %v76 = vrot.slane %v22, %v75
    %v77 = vlaneseq
    %v78 = vshrl.u32 %v77, 7
    %v79 = vsub.s32 4, %v78
    %v80 = vrot.slane %v22, %v79
    %v81 = vlaneseq
    %v82 = vshrl.u32 %v81, 7
    %v83 = vsub.s32 0, %v82
    %v84 = vrot.slane %v23, %v83
    %v85 = vlaneseq
    %v86 = vshrl.u32 %v85, 7
    %v87 = vsub.s32 1, %v86
    %v88 = vrot.slane %v23, %v87
    %v89 = vlaneseq
    %v90 = vshrl.u32 %v89, 7
    %v91 = vsub.s32 2, %v90
    %v92 = vrot.slane %v23, %v91
    %v93 = vlaneseq
    %v94 = vshrl.u32 %v93, 7
    %v95 = vsub.s32 3, %v94
    %v96 = vrot.slane %v23, %v95
    %v97 = vlaneseq
    %v98 = vshrl.u32 %v97, 7
    %v99 = vsub.s32 4, %v98
    %v100 = vrot.slane %v23, %v99
    %v101 = vlaneseq
    %v102 = vshrl.u32 %v101, 7
    %v103 = vsub.s32 5, %v102
    %v104 = vrot.slane %v23, %v103
    %v105 = vlaneseq
    %v106 = vshrl.u32 %v105, 7
    %v107 = vsub.s32 6, %v106
    %v108 = vrot.slane %v23, %v107
    %v109 = vlaneseq
    %v110 = vshrl.u32 %v109, 7
    %v111 = vsub.s32 7, %v110
    %v112 = vrot.slane %v23, %v111
    %v113 = vlaneseq
    %v114 = vshrl.u32 %v113, 7
    %v115 = vsub.s32 0, %v114
    %v116 = vrot.slane %v24, %v115
    %v117 = vlaneseq
    %v118 = vshrl.u32 %v117, 7
    %v119 = vsub.s32 1, %v118
    %v120 = vrot.slane %v24, %v119
    %v121 = vlaneseq
    %v122 = vshrl.u32 %v121, 7
    %v123 = vsub.s32 2, %v122
    %v124 = vrot.slane %v24, %v123
    %v125 = vlaneseq
    %v126 = vshrl.u32 %v125, 7
    %v127 = vsub.s32 3, %v126
    %v128 = vrot.slane %v24, %v127
    %v129 = vlaneseq
    %v130 = vshrl.u32 %v129, 7
    %v131 = vsub.s32 4, %v130
    %v132 = vrot.slane %v24, %v131
    %vm159 = vcmask 1040384
    %v160 = vsel %vm159, %v32, 0.0
    %v161 = vsel %vm159, %v84, 0.0
    %v162 = vadd.f32 %v160, %v161
    %v163 = vsel %vm159, %v36, 0.0
    %v164 = vsel %vm159, %v88, 0.0
    %v165 = vadd.f32 %v163, %v164
    %v166 = vsel %vm159, %v40, 0.0
    %v167 = vsel %vm159, %v92, 0.0
    %v168 = vadd.f32 %v166, %v167
    %v169 = vsel %vm159, %v44, 0.0
    %v170 = vsel %vm159, %v96, 0.0
    %v171 = vadd.f32 %v169, %v170
    %v172 = vsel %vm159, %v48, 0.0
    %v173 = vsel %vm159, %v100, 0.0
    %v174 = vadd.f32 %v172, %v173
    %v175 = vsel %vm159, %v52, 0.0
    %v176 = vsel %vm159, %v104, 0.0
    %v177 = vadd.f32 %v175, %v176
    %v178 = vsel %vm159, %v56, 0.0
    %v179 = vsel %vm159, %v108, 0.0
    %v180 = vadd.f32 %v178, %v179
    %v181 = vsel %vm159, %v60, 0.0
    %v182 = vsel %vm159, %v112, 0.0
    %v183 = vadd.f32 %v181, %v182
    %v184 = vsel %vm159, %v64, 0.0
    %v185 = vsel %vm159, %v116, 0.0
    %v186 = vadd.f32 %v184, %v185
    %v187 = vsel %vm159, %v68, 0.0
    %v188 = vsel %vm159, %v120, 0.0
    %v189 = vadd.f32 %v187, %v188
    %v190 = vsel %vm159, %v72, 0.0
    %v191 = vsel %vm159, %v124, 0.0
    %v192 = vadd.f32 %v190, %v191
    %v193 = vsel %vm159, %v76, 0.0
    %v194 = vsel %vm159, %v128, 0.0
    %v195 = vadd.f32 %v193, %v194
    %vm196 = vcmask 516096
    %v197 = vsel %vm196, %v80, 0.0
    %v198 = vsel %vm196, %v132, 0.0
    %v199 = vadd.f32 %v197, %v198
    %v200 = vmul.f32 %v21, %v21
    %v201 = vmul.f32 %v22, %v22
    %v202 = vmul.f32 %v23, %v23
    %v203 = vmul.f32 %v24, %v24
    %v208 = vlaneseq
    %v209 = vshrl.u32 %v208, 7
    %v210 = vsub.s32 0, %v209
    %v211 = vrot.slane %v200, %v210
    %v212 = vlaneseq
    %v213 = vshrl.u32 %v212, 7
    %v214 = vsub.s32 1, %v213
    %v215 = vrot.slane %v200, %v214
    %v216 = vlaneseq
    %v217 = vshrl.u32 %v216, 7
    %v218 = vsub.s32 2, %v217
    %v219 = vrot.slane %v200, %v218
    %v220 = vlaneseq
    %v221 = vshrl.u32 %v220, 7
    %v222 = vsub.s32 3, %v221
    %v223 = vrot.slane %v200, %v222
    %v224 = vlaneseq
    %v225 = vshrl.u32 %v224, 7
    %v226 = vsub.s32 4, %v225
    %v227 = vrot.slane %v200, %v226
    %v228 = vlaneseq
    %v229 = vshrl.u32 %v228, 7
    %v230 = vsub.s32 5, %v229
    %v231 = vrot.slane %v200, %v230
    %v232 = vlaneseq
    %v233 = vshrl.u32 %v232, 7
    %v234 = vsub.s32 6, %v233
    %v235 = vrot.slane %v200, %v234
    %v236 = vlaneseq
    %v237 = vshrl.u32 %v236, 7
    %v238 = vsub.s32 7, %v237
    %v239 = vrot.slane %v200, %v238
    %v240 = vlaneseq
    %v241 = vshrl.u32 %v240, 7
    %v242 = vsub.s32 0, %v241
    %v243 = vrot.slane %v201, %v242
    %v244 = vlaneseq
    %v245 = vshrl.u32 %v244, 7
    %v246 = vsub.s32 1, %v245
    %v247 = vrot.slane %v201, %v246
    %v248 = vlaneseq
    %v249 = vshrl.u32 %v248, 7
    %v250 = vsub.s32 2, %v249
    %v251 = vrot.slane %v201, %v250
    %v252 = vlaneseq
    %v253 = vshrl.u32 %v252, 7
    %v254 = vsub.s32 3, %v253
    %v255 = vrot.slane %v201, %v254
    %v256 = vlaneseq
    %v257 = vshrl.u32 %v256, 7
    %v258 = vsub.s32 4, %v257
    %v259 = vrot.slane %v201, %v258
    %v260 = vlaneseq
    %v261 = vshrl.u32 %v260, 7
    %v262 = vsub.s32 0, %v261
    %v263 = vrot.slane %v202, %v262
    %v264 = vlaneseq
    %v265 = vshrl.u32 %v264, 7
    %v266 = vsub.s32 1, %v265
    %v267 = vrot.slane %v202, %v266
    %v268 = vlaneseq
    %v269 = vshrl.u32 %v268, 7
    %v270 = vsub.s32 2, %v269
    %v271 = vrot.slane %v202, %v270
    %v272 = vlaneseq
    %v273 = vshrl.u32 %v272, 7
    %v274 = vsub.s32 3, %v273
    %v275 = vrot.slane %v202, %v274
    %v276 = vlaneseq
    %v277 = vshrl.u32 %v276, 7
    %v278 = vsub.s32 4, %v277
    %v279 = vrot.slane %v202, %v278
    %v280 = vlaneseq
    %v281 = vshrl.u32 %v280, 7
    %v282 = vsub.s32 5, %v281
    %v283 = vrot.slane %v202, %v282
    %v284 = vlaneseq
    %v285 = vshrl.u32 %v284, 7
    %v286 = vsub.s32 6, %v285
    %v287 = vrot.slane %v202, %v286
    %v288 = vlaneseq
    %v289 = vshrl.u32 %v288, 7
    %v290 = vsub.s32 7, %v289
    %v291 = vrot.slane %v202, %v290
    %v292 = vlaneseq
    %v293 = vshrl.u32 %v292, 7
    %v294 = vsub.s32 0, %v293
    %v295 = vrot.slane %v203, %v294
    %v296 = vlaneseq
    %v297 = vshrl.u32 %v296, 7
    %v298 = vsub.s32 1, %v297
    %v299 = vrot.slane %v203, %v298
    %v300 = vlaneseq
    %v301 = vshrl.u32 %v300, 7
    %v302 = vsub.s32 2, %v301
    %v303 = vrot.slane %v203, %v302
    %v304 = vlaneseq
    %v305 = vshrl.u32 %v304, 7
    %v306 = vsub.s32 3, %v305
    %v307 = vrot.slane %v203, %v306
    %v308 = vlaneseq
    %v309 = vshrl.u32 %v308, 7
    %v310 = vsub.s32 4, %v309
    %v311 = vrot.slane %v203, %v310
    %v338 = vsel %vm159, %v211, 0.0
    %v339 = vsel %vm159, %v263, 0.0
    %v340 = vadd.f32 %v338, %v339
    %v341 = vsel %vm159, %v215, 0.0
    %v342 = vsel %vm159, %v267, 0.0
    %v343 = vadd.f32 %v341, %v342
    %v344 = vsel %vm159, %v219, 0.0
    %v345 = vsel %vm159, %v271, 0.0
    %v346 = vadd.f32 %v344, %v345
    %v347 = vsel %vm159, %v223, 0.0
    %v348 = vsel %vm159, %v275, 0.0
    %v349 = vadd.f32 %v347, %v348
    %v350 = vsel %vm159, %v227, 0.0
    %v351 = vsel %vm159, %v279, 0.0
    %v352 = vadd.f32 %v350, %v351
    %v353 = vsel %vm159, %v231, 0.0
    %v354 = vsel %vm159, %v283, 0.0
    %v355 = vadd.f32 %v353, %v354
    %v356 = vsel %vm159, %v235, 0.0
    %v357 = vsel %vm159, %v287, 0.0
    %v358 = vadd.f32 %v356, %v357
    %v359 = vsel %vm159, %v239, 0.0
    %v360 = vsel %vm159, %v291, 0.0
    %v361 = vadd.f32 %v359, %v360
    %v362 = vsel %vm159, %v243, 0.0
    %v363 = vsel %vm159, %v295, 0.0
    %v364 = vadd.f32 %v362, %v363
    %v365 = vsel %vm159, %v247, 0.0
    %v366 = vsel %vm159, %v299, 0.0
    %v367 = vadd.f32 %v365, %v366
    %v368 = vsel %vm159, %v251, 0.0
    %v369 = vsel %vm159, %v303, 0.0
    %v370 = vadd.f32 %v368, %v369
    %v371 = vsel %vm159, %v255, 0.0
    %v372 = vsel %vm159, %v307, 0.0
    %v373 = vadd.f32 %v371, %v372
    %v374 = vsel %vm196, %v259, 0.0
    %v375 = vsel %vm196, %v311, 0.0
    %v376 = vadd.f32 %v374, %v375
    %v377 = vld [vmem:[%s3] sm:$0xff]
    %v378 = vld [vmem:[%s3 + $0x8] sm:$0xff]
    %v379 = vld [vmem:[%s3 + $0x10] sm:$0xff]
    %v380 = vld [vmem:[%s3 + $0x18] sm:$0xff]
    %v381 = vld [vmem:[%s3 + $0x20] sm:$0xff]
    %v382 = vld [vmem:[%s3 + $0x28] sm:$0xff]
    %v383 = vld [vmem:[%s3 + $0x30] sm:$0xff]
    %v384 = vld [vmem:[%s3 + $0x38] sm:$0xff]
    %v385 = vld [vmem:[%s3 + $0x40] sm:$0xff]
    %v386 = vld [vmem:[%s3 + $0x48] sm:$0xff]
    %v387 = vld [vmem:[%s3 + $0x50] sm:$0xff]
    %v388 = vld [vmem:[%s3 + $0x58] sm:$0xff]
    %v389 = vld [vmem:[%s3 + $0x60] sm:$0xff]
    %v390 = vld [vmem:[%s3 + $0x68] sm:$0xff]
    %v391 = vld [vmem:[%s3 + $0x70] sm:$0xff]
    %v392 = vld [vmem:[%s3 + $0x78] sm:$0xff]
    %v393 = vld [vmem:[%s3 + $0x80] sm:$0xff]
    %v394 = vld [vmem:[%s3 + $0x88] sm:$0xff]
    %v395 = vld [vmem:[%s3 + $0x90] sm:$0xff]
    %v396 = vld [vmem:[%s3 + $0x98] sm:$0xff]
    %v397 = vld [vmem:[%s3 + $0xa0] sm:$0xff]
    %v398 = vld [vmem:[%s3 + $0xa8] sm:$0xff]
    %v399 = vld [vmem:[%s3 + $0xb0] sm:$0xff]
    %v400 = vld [vmem:[%s3 + $0xb8] sm:$0xff]
    %v401 = vld [vmem:[%s3 + $0xc0] sm:$0xff]
    %v402 = vld [vmem:[%s3 + $0xc8] sm:$0xff]
    %v403 = vld [vmem:[%s3 + $0xd0] sm:$0xff]
    %v404 = vld [vmem:[%s3 + $0xd8] sm:$0xff]
    %v405 = vld [vmem:[%s3 + $0xe0] sm:$0xff]
    %v406 = vld [vmem:[%s3 + $0xe8] sm:$0xff]
    %v407 = vld [vmem:[%s3 + $0xf0] sm:$0xff]
    %v408 = vld [vmem:[%s3 + $0xf8] sm:$0xff]
    %v409 = vld [vmem:[%s3 + $0x100] sm:$0xff]
    %v410 = vld [vmem:[%s3 + $0x108] sm:$0xff]
    %v411 = vld [vmem:[%s3 + $0x110] sm:$0xff]
    %v412 = vld [vmem:[%s3 + $0x118] sm:$0xff]
    %v413 = vld [vmem:[%s3 + $0x120] sm:$0xff]
    %v414 = vld [vmem:[%s3 + $0x128] sm:$0xff]
    %v415 = vld [vmem:[%s3 + $0x130] sm:$0xff]
    %v416 = vld [vmem:[%s3 + $0x138] sm:$0xff]
    %v417 = vld [vmem:[%s3 + $0x140] sm:$0xff]
    %v418 = vld [vmem:[%s3 + $0x148] sm:$0xff]
    %v419 = vld [vmem:[%s3 + $0x150] sm:$0xff]
    %v420 = vld [vmem:[%s3 + $0x158] sm:$0xff]
    %v421 = vld [vmem:[%s3 + $0x160] sm:$0xff]
    %v422 = vld [vmem:[%s3 + $0x168] sm:$0xff]
    %v423 = vld [vmem:[%s3 + $0x170] sm:$0xff]
    %v424 = vld [vmem:[%s3 + $0x178] sm:$0xff]
    %v425 = vld [vmem:[%s3 + $0x180] sm:$0xff]
    %v426 = vld [vmem:[%s3 + $0x188] sm:$0xff]
    %v427 = vld [vmem:[%s3 + $0x190] sm:$0xff]
    %v428 = vld [vmem:[%s3 + $0x198] sm:$0xff]
    %v429 = vld [vmem:[%s3 + $0x1a0] sm:$0xff]
    %v430 = vld [vmem:[%s3 + $0x1a8] sm:$0xff]
    %v431 = vld [vmem:[%s3 + $0x1b0] sm:$0xff]
    %v432 = vld [vmem:[%s3 + $0x1b8] sm:$0xff]
    %v433 = vld [vmem:[%s3 + $0x1c0] sm:$0xff]
    %v434 = vld [vmem:[%s3 + $0x1c8] sm:$0xff]
    %v435 = vld [vmem:[%s3 + $0x1d0] sm:$0xff]
    %v436 = vld [vmem:[%s3 + $0x1d8] sm:$0xff]
    %v437 = vld [vmem:[%s3 + $0x1e0] sm:$0xff]
    %v438 = vld [vmem:[%s3 + $0x1e8] sm:$0xff]
    %v439 = vld [vmem:[%s3 + $0x1f0] sm:$0xff]
    %v440 = vld [vmem:[%s3 + $0x1f8] sm:$0xff]
    %v441 = vld [vmem:[%s3 + $0x200] sm:$0xff]
    %v442 = vld [vmem:[%s3 + $0x208] sm:$0xff]
    %v443 = vld [vmem:[%s3 + $0x210] sm:$0xff]
    %v444 = vld [vmem:[%s3 + $0x218] sm:$0xff]
    %v445 = vld [vmem:[%s3 + $0x220] sm:$0xff]
    %v446 = vld [vmem:[%s3 + $0x228] sm:$0xff]
    %v447 = vld [vmem:[%s3 + $0x230] sm:$0xff]
    %v448 = vld [vmem:[%s3 + $0x238] sm:$0xff]
    %v449 = vld [vmem:[%s3 + $0x240] sm:$0xff]
    %v450 = vld [vmem:[%s3 + $0x248] sm:$0xff]
    %v451 = vld [vmem:[%s3 + $0x250] sm:$0xff]
    %v452 = vld [vmem:[%s3 + $0x258] sm:$0xff]
    %v453 = vld [vmem:[%s3 + $0x260] sm:$0xff]
    %v454 = vld [vmem:[%s3 + $0x268] sm:$0xff]
    %v455 = vld [vmem:[%s3 + $0x270] sm:$0xff]
    %v456 = vld [vmem:[%s3 + $0x278] sm:$0xff]
    %v457 = vld [vmem:[%s3 + $0x280] sm:$0xff]
    %v458 = vld [vmem:[%s3 + $0x288] sm:$0xff]
    %v459 = vld [vmem:[%s3 + $0x290] sm:$0xff]
    %v460 = vld [vmem:[%s3 + $0x298] sm:$0xff]
    %v461 = vld [vmem:[%s3 + $0x2a0] sm:$0xff]
    %v462 = vld [vmem:[%s3 + $0x2a8] sm:$0xff]
    %v463 = vld [vmem:[%s3 + $0x2b0] sm:$0xff]
    %v464 = vld [vmem:[%s3 + $0x2b8] sm:$0xff]
    %v465 = vld [vmem:[%s3 + $0x2c0] sm:$0xff]
    %v466 = vld [vmem:[%s3 + $0x2c8] sm:$0xff]
    %v467 = vld [vmem:[%s3 + $0x2d0] sm:$0xff]
    %v468 = vld [vmem:[%s3 + $0x2d8] sm:$0xff]
    %v469 = vld [vmem:[%s3 + $0x2e0] sm:$0xff]
    %v470 = vld [vmem:[%s3 + $0x2e8] sm:$0xff]
    %v471 = vld [vmem:[%s3 + $0x2f0] sm:$0xff]
    %v472 = vld [vmem:[%s3 + $0x2f8] sm:$0xff]
    %v473 = vld [vmem:[%s3 + $0x300] sm:$0xff]
    %v474 = vld [vmem:[%s3 + $0x308] sm:$0xff]
    %v475 = vld [vmem:[%s3 + $0x310] sm:$0xff]
    %v476 = vld [vmem:[%s3 + $0x318] sm:$0xff]
    %v477 = vld [vmem:[%s3 + $0x320] sm:$0xff]
    %v478 = vld [vmem:[%s3 + $0x328] sm:$0xff]
    %v479 = vld [vmem:[%s3 + $0x330] sm:$0xff]
    %v480 = vld [vmem:[%s3 + $0x338] sm:$0xff]
    %v481 = vld [vmem:[%s3 + $0x340] sm:$0xff]
    %v482 = vld [vmem:[%s3 + $0x348] sm:$0xff]
    %v483 = vld [vmem:[%s3 + $0x350] sm:$0xff]
    %v484 = vld [vmem:[%s3 + $0x358] sm:$0xff]
    %v485 = vld [vmem:[%s3 + $0x360] sm:$0xff]
    %v486 = vld [vmem:[%s3 + $0x368] sm:$0xff]
    %v487 = vld [vmem:[%s3 + $0x370] sm:$0xff]
    %v488 = vld [vmem:[%s3 + $0x378] sm:$0xff]
    %v489 = vld [vmem:[%s3 + $0x380] sm:$0xff]
    %v490 = vld [vmem:[%s3 + $0x388] sm:$0xff]
    %v491 = vld [vmem:[%s3 + $0x390] sm:$0xff]
    %v492 = vld [vmem:[%s3 + $0x398] sm:$0xff]
    %v493 = vld [vmem:[%s3 + $0x3a0] sm:$0xff]
    %v494 = vld [vmem:[%s3 + $0x3a8] sm:$0xff]
    %v495 = vld [vmem:[%s3 + $0x3b0] sm:$0xff]
    %v496 = vld [vmem:[%s3 + $0x3b8] sm:$0xff]
    %v497 = vld [vmem:[%s3 + $0x3c0] sm:$0xff]
    %v498 = vld [vmem:[%s3 + $0x3c8] sm:$0xff]
    %v499 = vld [vmem:[%s3 + $0x3d0] sm:$0xff]
    %v500 = vld [vmem:[%s3 + $0x3d8] sm:$0xff]
    %v501 = vld [vmem:[%s3 + $0x3e0] sm:$0xff]
    %v502 = vld [vmem:[%s3 + $0x3e8] sm:$0xff]
    %v503 = vld [vmem:[%s3 + $0x3f0] sm:$0xff]
    %v504 = vld [vmem:[%s3 + $0x3f8] sm:$0xff]
    %v505 = vld [vmem:[%s3 + $0x400] sm:$0xff]
    %v506 = vld [vmem:[%s3 + $0x408] sm:$0xff]
    %v507 = vld [vmem:[%s3 + $0x410] sm:$0xff]
    %v508 = vld [vmem:[%s3 + $0x418] sm:$0xff]
    %v509 = vld [vmem:[%s3 + $0x420] sm:$0xff]
    %v510 = vld [vmem:[%s3 + $0x428] sm:$0xff]
    %v511 = vld [vmem:[%s3 + $0x430] sm:$0xff]
    %v512 = vld [vmem:[%s3 + $0x438] sm:$0xff]
    %v513 = vld [vmem:[%s3 + $0x440] sm:$0xff]
    %v514 = vld [vmem:[%s3 + $0x448] sm:$0xff]
    %v515 = vld [vmem:[%s3 + $0x450] sm:$0xff]
    %v516 = vld [vmem:[%s3 + $0x458] sm:$0xff]
    %v517 = vld [vmem:[%s3 + $0x460] sm:$0xff]
    %v518 = vld [vmem:[%s3 + $0x468] sm:$0xff]
    %v519 = vld [vmem:[%s3 + $0x470] sm:$0xff]
    %v520 = vld [vmem:[%s3 + $0x478] sm:$0xff]
    %v521 = vld [vmem:[%s3 + $0x480] sm:$0xff]
    %v522 = vld [vmem:[%s3 + $0x488] sm:$0xff]
    %v523 = vld [vmem:[%s3 + $0x490] sm:$0xff]
    %v524 = vld [vmem:[%s3 + $0x498] sm:$0xff]
    %v525 = vld [vmem:[%s3 + $0x4a0] sm:$0xff]
    %v526 = vld [vmem:[%s3 + $0x4a8] sm:$0xff]
    %v527 = vld [vmem:[%s3 + $0x4b0] sm:$0xff]
    %v528 = vld [vmem:[%s3 + $0x4b8] sm:$0xff]
    %v529 = vld [vmem:[%s3 + $0x4c0] sm:$0xff]
    %v530 = vld [vmem:[%s3 + $0x4c8] sm:$0xff]
    %v531 = vld [vmem:[%s3 + $0x4d0] sm:$0xff]
    %v532 = vld [vmem:[%s3 + $0x4d8] sm:$0xff]
    %v533 = vld [vmem:[%s3 + $0x4e0] sm:$0xff]
    %v534 = vld [vmem:[%s3 + $0x4e8] sm:$0xff]
    %v535 = vld [vmem:[%s3 + $0x4f0] sm:$0xff]
    %v536 = vld [vmem:[%s3 + $0x4f8] sm:$0xff]
    %v537 = vld [vmem:[%s3 + $0x500] sm:$0xff]
    %v538 = vld [vmem:[%s3 + $0x508] sm:$0xff]
    %v539 = vld [vmem:[%s3 + $0x510] sm:$0xff]
    %v540 = vld [vmem:[%s3 + $0x518] sm:$0xff]
    %v541 = vld [vmem:[%s3 + $0x520] sm:$0xff]
    %v542 = vld [vmem:[%s3 + $0x528] sm:$0xff]
    %v543 = vld [vmem:[%s3 + $0x530] sm:$0xff]
    %v544 = vld [vmem:[%s3 + $0x538] sm:$0xff]
    %v545 = vld [vmem:[%s3 + $0x540] sm:$0xff]
    %v546 = vld [vmem:[%s3 + $0x548] sm:$0xff]
    %v547 = vld [vmem:[%s3 + $0x550] sm:$0xff]
    %v548 = vld [vmem:[%s3 + $0x558] sm:$0xff]
    %v549 = vld [vmem:[%s3 + $0x560] sm:$0xff]
    %v550 = vld [vmem:[%s3 + $0x568] sm:$0xff]
    %v551 = vld [vmem:[%s3 + $0x570] sm:$0xff]
    %v552 = vld [vmem:[%s3 + $0x578] sm:$0xff]
    %v553 = vld [vmem:[%s3 + $0x580] sm:$0xff]
    %v554 = vld [vmem:[%s3 + $0x588] sm:$0xff]
    %v555 = vld [vmem:[%s3 + $0x590] sm:$0xff]
    %v556 = vld [vmem:[%s3 + $0x598] sm:$0xff]
    %v557 = vld [vmem:[%s3 + $0x5a0] sm:$0xff]
    %v558 = vld [vmem:[%s3 + $0x5a8] sm:$0xff]
    %v559 = vld [vmem:[%s3 + $0x5b0] sm:$0xff]
    %v560 = vld [vmem:[%s3 + $0x5b8] sm:$0xff]
    %v561 = vld [vmem:[%s3 + $0x5c0] sm:$0xff]
    %v562 = vld [vmem:[%s3 + $0x5c8] sm:$0xff]
    %v563 = vld [vmem:[%s3 + $0x5d0] sm:$0xff]
    %v564 = vld [vmem:[%s3 + $0x5d8] sm:$0xff]
    %v565 = vld [vmem:[%s3 + $0x5e0] sm:$0xff]
    %v566 = vld [vmem:[%s3 + $0x5e8] sm:$0xff]
    %v567 = vld [vmem:[%s3 + $0x5f0] sm:$0xff]
    %v568 = vld [vmem:[%s3 + $0x5f8] sm:$0xff]
    %v569 = vld [vmem:[%s3 + $0x600] sm:$0xff]
    %v570 = vld [vmem:[%s3 + $0x608] sm:$0xff]
    %v571 = vld [vmem:[%s3 + $0x610] sm:$0xff]
    %v572 = vld [vmem:[%s3 + $0x618] sm:$0xff]
    %v573 = vld [vmem:[%s3 + $0x620] sm:$0xff]
    %v574 = vld [vmem:[%s3 + $0x628] sm:$0xff]
    %v575 = vld [vmem:[%s3 + $0x630] sm:$0xff]
    %v576 = vld [vmem:[%s3 + $0x638] sm:$0xff]
    %vm577 = vcmask 523264
    %v579 = vsel %vm577, %v199, 0
    %581 = vmatprep.subr.mxu0 0.0
    %582 = vmatpush1.msra.mxu0 %v392
    %583 = vmatprep.subr.mxu0 0.0
    %584 = vmatpush1.msra.mxu0 %v391
    %585 = vmatprep.subr.mxu0 0.0
    %586 = vmatpush1.msra.mxu0 %v390
    %587 = vmatprep.subr.mxu0 0.0
    %588 = vmatpush1.msra.mxu0 %v389
    %589 = vmatprep.subr.mxu0 0.0
    %590 = vmatpush1.msra.mxu0 %v388
    %591 = vmatprep.subr.mxu0 0.0
    %592 = vmatpush1.msra.mxu0 %v387
    %593 = vmatprep.subr.mxu0 0.0
    %594 = vmatpush1.msra.mxu0 %v386
    %595 = vmatprep.subr.mxu0 0.0
    %596 = vmatpush1.msra.mxu0 %v385
    %597 = vmatprep.subr.mxu0 0.0
    %598 = vmatpush1.msra.mxu0 %v384
    %599 = vmatprep.subr.mxu0 0.0
    %600 = vmatpush1.msra.mxu0 %v383
    %601 = vmatprep.subr.mxu0 0.0
    %602 = vmatpush1.msra.mxu0 %v382
    %603 = vmatprep.subr.mxu0 0.0
    %604 = vmatpush1.msra.mxu0 %v381
    %605 = vmatprep.subr.mxu0 0.0
    %606 = vmatpush1.msra.mxu0 %v380
    %607 = vmatprep.subr.mxu0 0.0
    %608 = vmatpush1.msra.mxu0 %v379
    %609 = vmatprep.subr.mxu0 0.0
    %610 = vmatpush1.msra.mxu0 %v378
    %611 = vmatprep.subr.mxu0 0.0
    %612 = vmatpush1.msra.mxu0 %v377
    %613 = vmatprep.subr.mxu0 0.0
    %614 = vmatpush2.msra.mxu0 %v408
    %615 = vmatprep.subr.mxu0 0.0
    %616 = vmatpush2.msra.mxu0 %v407
    %617 = vmatprep.subr.mxu0 0.0
    %618 = vmatpush2.msra.mxu0 %v406
    %619 = vmatprep.subr.mxu0 0.0
    %620 = vmatpush2.msra.mxu0 %v405
    %621 = vmatprep.subr.mxu0 0.0
    %622 = vmatpush2.msra.mxu0 %v404
    %623 = vmatprep.subr.mxu0 0.0
    %624 = vmatpush2.msra.mxu0 %v403
    %625 = vmatprep.subr.mxu0 0.0
    %626 = vmatpush2.msra.mxu0 %v402
    %627 = vmatprep.subr.mxu0 0.0
    %628 = vmatpush2.msra.mxu0 %v401
    %629 = vmatprep.subr.mxu0 0.0
    %630 = vmatpush2.msra.mxu0 %v400
    %631 = vmatprep.subr.mxu0 0.0
    %632 = vmatpush2.msra.mxu0 %v399
    %633 = vmatprep.subr.mxu0 0.0
    %634 = vmatpush2.msra.mxu0 %v398
    %635 = vmatprep.subr.mxu0 0.0
    %636 = vmatpush2.msra.mxu0 %v397
    %637 = vmatprep.subr.mxu0 0.0
    %638 = vmatpush2.msra.mxu0 %v396
    %639 = vmatprep.subr.mxu0 0.0
    %640 = vmatpush2.msra.mxu0 %v395
    %641 = vmatprep.subr.mxu0 0.0
    %642 = vmatpush2.msra.mxu0 %v394
    %643 = vmatprep.subr.mxu0 0.0
    %644 = vmatpush2.msra.mxu0 %v393
    %645 = vmatprep.mubr.f32.mxu0 %v165
    %646 = vmatmul.mubr.f32.gmra.mxu0 %v162
    %v647 = vpop.f32.mrf.mxu0
    %v648 = vadd.f32 0.0, %v647
    %v649 = vpop.f32.mrf.mxu0
    %650 = vdwg.mxu0
    %651 = vmatprep.subr.mxu0 0.0
    %652 = vmatpush1.msra.mxu0 %v424
    %653 = vmatprep.subr.mxu0 0.0
    %654 = vmatpush1.msra.mxu0 %v423
    %655 = vmatprep.subr.mxu0 0.0
    %656 = vmatpush1.msra.mxu0 %v422
    %657 = vmatprep.subr.mxu0 0.0
    %658 = vmatpush1.msra.mxu0 %v421
    %659 = vmatprep.subr.mxu0 0.0
    %660 = vmatpush1.msra.mxu0 %v420
    %661 = vmatprep.subr.mxu0 0.0
    %662 = vmatpush1.msra.mxu0 %v419
    %663 = vmatprep.subr.mxu0 0.0
    %664 = vmatpush1.msra.mxu0 %v418
    %665 = vmatprep.subr.mxu0 0.0
    %666 = vmatpush1.msra.mxu0 %v417
    %667 = vmatprep.subr.mxu0 0.0
    %668 = vmatpush1.msra.mxu0 %v416
    %669 = vmatprep.subr.mxu0 0.0
    %670 = vmatpush1.msra.mxu0 %v415
    %671 = vmatprep.subr.mxu0 0.0
    %672 = vmatpush1.msra.mxu0 %v414
    %673 = vmatprep.subr.mxu0 0.0
    %674 = vmatpush1.msra.mxu0 %v413
    %675 = vmatprep.subr.mxu0 0.0
    %676 = vmatpush1.msra.mxu0 %v412
    %677 = vmatprep.subr.mxu0 0.0
    %678 = vmatpush1.msra.mxu0 %v411
    %679 = vmatprep.subr.mxu0 0.0
    %680 = vmatpush1.msra.mxu0 %v410
    %681 = vmatprep.subr.mxu0 0.0
    %682 = vmatpush1.msra.mxu0 %v409
    %683 = vmatprep.subr.mxu0 0.0
    %684 = vmatpush2.msra.mxu0 %v440
    %685 = vmatprep.subr.mxu0 0.0
    %686 = vmatpush2.msra.mxu0 %v439
    %687 = vmatprep.subr.mxu0 0.0
    %688 = vmatpush2.msra.mxu0 %v438
    %689 = vmatprep.subr.mxu0 0.0
    %690 = vmatpush2.msra.mxu0 %v437
    %691 = vmatprep.subr.mxu0 0.0
    %692 = vmatpush2.msra.mxu0 %v436
    %693 = vmatprep.subr.mxu0 0.0
    %694 = vmatpush2.msra.mxu0 %v435
    %695 = vmatprep.subr.mxu0 0.0
    %696 = vmatpush2.msra.mxu0 %v434
    %697 = vmatprep.subr.mxu0 0.0
    %698 = vmatpush2.msra.mxu0 %v433
    %699 = vmatprep.subr.mxu0 0.0
    %700 = vmatpush2.msra.mxu0 %v432
    %701 = vmatprep.subr.mxu0 0.0
    %702 = vmatpush2.msra.mxu0 %v431
    %703 = vmatprep.subr.mxu0 0.0
    %704 = vmatpush2.msra.mxu0 %v430
    %705 = vmatprep.subr.mxu0 0.0
    %706 = vmatpush2.msra.mxu0 %v429
    %707 = vmatprep.subr.mxu0 0.0
    %708 = vmatpush2.msra.mxu0 %v428
    %709 = vmatprep.subr.mxu0 0.0
    %710 = vmatpush2.msra.mxu0 %v427
    %711 = vmatprep.subr.mxu0 0.0
    %712 = vmatpush2.msra.mxu0 %v426
    %713 = vmatprep.subr.mxu0 0.0
    %714 = vmatpush2.msra.mxu0 %v425
    %715 = vmatprep.mubr.f32.mxu0 %v171
    %716 = vmatmul.mubr.f32.gmra.mxu0 %v168
    %v717 = vpop.f32.mrf.mxu0
    %v718 = vadd.f32 %v648, %v717
    %v719 = vpop.f32.mrf.mxu0
    %720 = vdwg.mxu0
    %721 = vmatprep.subr.mxu0 0.0
    %722 = vmatpush1.msra.mxu0 %v456
    %723 = vmatprep.subr.mxu0 0.0
    %724 = vmatpush1.msra.mxu0 %v455
    %725 = vmatprep.subr.mxu0 0.0
    %726 = vmatpush1.msra.mxu0 %v454
    %727 = vmatprep.subr.mxu0 0.0
    %728 = vmatpush1.msra.mxu0 %v453
    %729 = vmatprep.subr.mxu0 0.0
    %730 = vmatpush1.msra.mxu0 %v452
    %731 = vmatprep.subr.mxu0 0.0
    %732 = vmatpush1.msra.mxu0 %v451
    %733 = vmatprep.subr.mxu0 0.0
    %734 = vmatpush1.msra.mxu0 %v450
    %735 = vmatprep.subr.mxu0 0.0
    %736 = vmatpush1.msra.mxu0 %v449
    %737 = vmatprep.subr.mxu0 0.0
    %738 = vmatpush1.msra.mxu0 %v448
    %739 = vmatprep.subr.mxu0 0.0
    %740 = vmatpush1.msra.mxu0 %v447
    %741 = vmatprep.subr.mxu0 0.0
    %742 = vmatpush1.msra.mxu0 %v446
    %743 = vmatprep.subr.mxu0 0.0
    %744 = vmatpush1.msra.mxu0 %v445
    %745 = vmatprep.subr.mxu0 0.0
    %746 = vmatpush1.msra.mxu0 %v444
    %747 = vmatprep.subr.mxu0 0.0
    %748 = vmatpush1.msra.mxu0 %v443
    %749 = vmatprep.subr.mxu0 0.0
    %750 = vmatpush1.msra.mxu0 %v442
    %751 = vmatprep.subr.mxu0 0.0
    %752 = vmatpush1.msra.mxu0 %v441
    %753 = vmatprep.subr.mxu0 0.0
    %754 = vmatpush2.msra.mxu0 %v472
    %755 = vmatprep.subr.mxu0 0.0
    %756 = vmatpush2.msra.mxu0 %v471
    %757 = vmatprep.subr.mxu0 0.0
    %758 = vmatpush2.msra.mxu0 %v470
    %759 = vmatprep.subr.mxu0 0.0
    %760 = vmatpush2.msra.mxu0 %v469
    %761 = vmatprep.subr.mxu0 0.0
    %762 = vmatpush2.msra.mxu0 %v468
    %763 = vmatprep.subr.mxu0 0.0
    %764 = vmatpush2.msra.mxu0 %v467
    %765 = vmatprep.subr.mxu0 0.0
    %766 = vmatpush2.msra.mxu0 %v466
    %767 = vmatprep.subr.mxu0 0.0
    %768 = vmatpush2.msra.mxu0 %v465
    %769 = vmatprep.subr.mxu0 0.0
    %770 = vmatpush2.msra.mxu0 %v464
    %771 = vmatprep.subr.mxu0 0.0
    %772 = vmatpush2.msra.mxu0 %v463
    %773 = vmatprep.subr.mxu0 0.0
    %774 = vmatpush2.msra.mxu0 %v462
    %775 = vmatprep.subr.mxu0 0.0
    %776 = vmatpush2.msra.mxu0 %v461
    %777 = vmatprep.subr.mxu0 0.0
    %778 = vmatpush2.msra.mxu0 %v460
    %779 = vmatprep.subr.mxu0 0.0
    %780 = vmatpush2.msra.mxu0 %v459
    %781 = vmatprep.subr.mxu0 0.0
    %782 = vmatpush2.msra.mxu0 %v458
    %783 = vmatprep.subr.mxu0 0.0
    %784 = vmatpush2.msra.mxu0 %v457
    %785 = vmatprep.mubr.f32.mxu0 %v177
    %786 = vmatmul.mubr.f32.gmra.mxu0 %v174
    %v787 = vpop.f32.mrf.mxu0
    %v788 = vadd.f32 %v718, %v787
    %v789 = vpop.f32.mrf.mxu0
    %790 = vdwg.mxu0
    %791 = vmatprep.subr.mxu0 0.0
    %792 = vmatpush1.msra.mxu0 %v488
    %793 = vmatprep.subr.mxu0 0.0
    %794 = vmatpush1.msra.mxu0 %v487
    %795 = vmatprep.subr.mxu0 0.0
    %796 = vmatpush1.msra.mxu0 %v486
    %797 = vmatprep.subr.mxu0 0.0
    %798 = vmatpush1.msra.mxu0 %v485
    %799 = vmatprep.subr.mxu0 0.0
    %800 = vmatpush1.msra.mxu0 %v484
    %801 = vmatprep.subr.mxu0 0.0
    %802 = vmatpush1.msra.mxu0 %v483
    %803 = vmatprep.subr.mxu0 0.0
    %804 = vmatpush1.msra.mxu0 %v482
    %805 = vmatprep.subr.mxu0 0.0
    %806 = vmatpush1.msra.mxu0 %v481
    %807 = vmatprep.subr.mxu0 0.0
    %808 = vmatpush1.msra.mxu0 %v480
    %809 = vmatprep.subr.mxu0 0.0
    %810 = vmatpush1.msra.mxu0 %v479
    %811 = vmatprep.subr.mxu0 0.0
    %812 = vmatpush1.msra.mxu0 %v478
    %813 = vmatprep.subr.mxu0 0.0
    %814 = vmatpush1.msra.mxu0 %v477
    %815 = vmatprep.subr.mxu0 0.0
    %816 = vmatpush1.msra.mxu0 %v476
    %817 = vmatprep.subr.mxu0 0.0
    %818 = vmatpush1.msra.mxu0 %v475
    %819 = vmatprep.subr.mxu0 0.0
    %820 = vmatpush1.msra.mxu0 %v474
    %821 = vmatprep.subr.mxu0 0.0
    %822 = vmatpush1.msra.mxu0 %v473
    %823 = vmatprep.subr.mxu0 0.0
    %824 = vmatpush2.msra.mxu0 %v504
    %825 = vmatprep.subr.mxu0 0.0
    %826 = vmatpush2.msra.mxu0 %v503
    %827 = vmatprep.subr.mxu0 0.0
    %828 = vmatpush2.msra.mxu0 %v502
    %829 = vmatprep.subr.mxu0 0.0
    %830 = vmatpush2.msra.mxu0 %v501
    %831 = vmatprep.subr.mxu0 0.0
    %832 = vmatpush2.msra.mxu0 %v500
    %833 = vmatprep.subr.mxu0 0.0
    %834 = vmatpush2.msra.mxu0 %v499
    %835 = vmatprep.subr.mxu0 0.0
    %836 = vmatpush2.msra.mxu0 %v498
    %837 = vmatprep.subr.mxu0 0.0
    %838 = vmatpush2.msra.mxu0 %v497
    %839 = vmatprep.subr.mxu0 0.0
    %840 = vmatpush2.msra.mxu0 %v496
    %841 = vmatprep.subr.mxu0 0.0
    %842 = vmatpush2.msra.mxu0 %v495
    %843 = vmatprep.subr.mxu0 0.0
    %844 = vmatpush2.msra.mxu0 %v494
    %845 = vmatprep.subr.mxu0 0.0
    %846 = vmatpush2.msra.mxu0 %v493
    %847 = vmatprep.subr.mxu0 0.0
    %848 = vmatpush2.msra.mxu0 %v492
    %849 = vmatprep.subr.mxu0 0.0
    %850 = vmatpush2.msra.mxu0 %v491
    %851 = vmatprep.subr.mxu0 0.0
    %852 = vmatpush2.msra.mxu0 %v490
    %853 = vmatprep.subr.mxu0 0.0
    %854 = vmatpush2.msra.mxu0 %v489
    %855 = vmatprep.mubr.f32.mxu0 %v183
    %856 = vmatmul.mubr.f32.gmra.mxu0 %v180
    %v857 = vpop.f32.mrf.mxu0
    %v858 = vadd.f32 %v788, %v857
    %v859 = vpop.f32.mrf.mxu0
    %860 = vdwg.mxu0
    %861 = vmatprep.subr.mxu0 0.0
    %862 = vmatpush1.msra.mxu0 %v520
    %863 = vmatprep.subr.mxu0 0.0
    %864 = vmatpush1.msra.mxu0 %v519
    %865 = vmatprep.subr.mxu0 0.0
    %866 = vmatpush1.msra.mxu0 %v518
    %867 = vmatprep.subr.mxu0 0.0
    %868 = vmatpush1.msra.mxu0 %v517
    %869 = vmatprep.subr.mxu0 0.0
    %870 = vmatpush1.msra.mxu0 %v516
    %871 = vmatprep.subr.mxu0 0.0
    %872 = vmatpush1.msra.mxu0 %v515
    %873 = vmatprep.subr.mxu0 0.0
    %874 = vmatpush1.msra.mxu0 %v514
    %875 = vmatprep.subr.mxu0 0.0
    %876 = vmatpush1.msra.mxu0 %v513
    %877 = vmatprep.subr.mxu0 0.0
    %878 = vmatpush1.msra.mxu0 %v512
    %879 = vmatprep.subr.mxu0 0.0
    %880 = vmatpush1.msra.mxu0 %v511
    %881 = vmatprep.subr.mxu0 0.0
    %882 = vmatpush1.msra.mxu0 %v510
    %883 = vmatprep.subr.mxu0 0.0
    %884 = vmatpush1.msra.mxu0 %v509
    %885 = vmatprep.subr.mxu0 0.0
    %886 = vmatpush1.msra.mxu0 %v508
    %887 = vmatprep.subr.mxu0 0.0
    %888 = vmatpush1.msra.mxu0 %v507
    %889 = vmatprep.subr.mxu0 0.0
    %890 = vmatpush1.msra.mxu0 %v506
    %891 = vmatprep.subr.mxu0 0.0
    %892 = vmatpush1.msra.mxu0 %v505
    %893 = vmatprep.subr.mxu0 0.0
    %894 = vmatpush2.msra.mxu0 %v536
    %895 = vmatprep.subr.mxu0 0.0
    %896 = vmatpush2.msra.mxu0 %v535
    %897 = vmatprep.subr.mxu0 0.0
    %898 = vmatpush2.msra.mxu0 %v534
    %899 = vmatprep.subr.mxu0 0.0
    %900 = vmatpush2.msra.mxu0 %v533
    %901 = vmatprep.subr.mxu0 0.0
    %902 = vmatpush2.msra.mxu0 %v532
    %903 = vmatprep.subr.mxu0 0.0
    %904 = vmatpush2.msra.mxu0 %v531
    %905 = vmatprep.subr.mxu0 0.0
    %906 = vmatpush2.msra.mxu0 %v530
    %907 = vmatprep.subr.mxu0 0.0
    %908 = vmatpush2.msra.mxu0 %v529
    %909 = vmatprep.subr.mxu0 0.0
    %910 = vmatpush2.msra.mxu0 %v528
    %911 = vmatprep.subr.mxu0 0.0
    %912 = vmatpush2.msra.mxu0 %v527
    %913 = vmatprep.subr.mxu0 0.0
    %914 = vmatpush2.msra.mxu0 %v526
    %915 = vmatprep.subr.mxu0 0.0
    %916 = vmatpush2.msra.mxu0 %v525
    %917 = vmatprep.subr.mxu0 0.0
    %918 = vmatpush2.msra.mxu0 %v524
    %919 = vmatprep.subr.mxu0 0.0
    %920 = vmatpush2.msra.mxu0 %v523
    %921 = vmatprep.subr.mxu0 0.0
    %922 = vmatpush2.msra.mxu0 %v522
    %923 = vmatprep.subr.mxu0 0.0
    %924 = vmatpush2.msra.mxu0 %v521
    %925 = vmatprep.mubr.f32.mxu0 %v189
    %926 = vmatmul.mubr.f32.gmra.mxu0 %v186
    %v927 = vpop.f32.mrf.mxu0
    %v928 = vadd.f32 %v858, %v927
    %v929 = vpop.f32.mrf.mxu0
    %930 = vdwg.mxu0
    %931 = vmatprep.subr.mxu0 0.0
    %932 = vmatpush1.msra.mxu0 %v552
    %933 = vmatprep.subr.mxu0 0.0
    %934 = vmatpush1.msra.mxu0 %v551
    %935 = vmatprep.subr.mxu0 0.0
    %936 = vmatpush1.msra.mxu0 %v550
    %937 = vmatprep.subr.mxu0 0.0
    %938 = vmatpush1.msra.mxu0 %v549
    %939 = vmatprep.subr.mxu0 0.0
    %940 = vmatpush1.msra.mxu0 %v548
    %941 = vmatprep.subr.mxu0 0.0
    %942 = vmatpush1.msra.mxu0 %v547
    %943 = vmatprep.subr.mxu0 0.0
    %944 = vmatpush1.msra.mxu0 %v546
    %945 = vmatprep.subr.mxu0 0.0
    %946 = vmatpush1.msra.mxu0 %v545
    %947 = vmatprep.subr.mxu0 0.0
    %948 = vmatpush1.msra.mxu0 %v544
    %949 = vmatprep.subr.mxu0 0.0
    %950 = vmatpush1.msra.mxu0 %v543
    %951 = vmatprep.subr.mxu0 0.0
    %952 = vmatpush1.msra.mxu0 %v542
    %953 = vmatprep.subr.mxu0 0.0
    %954 = vmatpush1.msra.mxu0 %v541
    %955 = vmatprep.subr.mxu0 0.0
    %956 = vmatpush1.msra.mxu0 %v540
    %957 = vmatprep.subr.mxu0 0.0
    %958 = vmatpush1.msra.mxu0 %v539
    %959 = vmatprep.subr.mxu0 0.0
    %960 = vmatpush1.msra.mxu0 %v538
    %961 = vmatprep.subr.mxu0 0.0
    %962 = vmatpush1.msra.mxu0 %v537
    %963 = vmatprep.subr.mxu0 0.0
    %964 = vmatpush2.msra.mxu0 %v568
    %965 = vmatprep.subr.mxu0 0.0
    %966 = vmatpush2.msra.mxu0 %v567
    %967 = vmatprep.subr.mxu0 0.0
    %968 = vmatpush2.msra.mxu0 %v566
    %969 = vmatprep.subr.mxu0 0.0
    %970 = vmatpush2.msra.mxu0 %v565
    %971 = vmatprep.subr.mxu0 0.0
    %972 = vmatpush2.msra.mxu0 %v564
    %973 = vmatprep.subr.mxu0 0.0
    %974 = vmatpush2.msra.mxu0 %v563
    %975 = vmatprep.subr.mxu0 0.0
    %976 = vmatpush2.msra.mxu0 %v562
    %977 = vmatprep.subr.mxu0 0.0
    %978 = vmatpush2.msra.mxu0 %v561
    %979 = vmatprep.subr.mxu0 0.0
    %980 = vmatpush2.msra.mxu0 %v560
    %981 = vmatprep.subr.mxu0 0.0
    %982 = vmatpush2.msra.mxu0 %v559
    %983 = vmatprep.subr.mxu0 0.0
    %984 = vmatpush2.msra.mxu0 %v558
    %985 = vmatprep.subr.mxu0 0.0
    %986 = vmatpush2.msra.mxu0 %v557
    %987 = vmatprep.subr.mxu0 0.0
    %988 = vmatpush2.msra.mxu0 %v556
    %989 = vmatprep.subr.mxu0 0.0
    %990 = vmatpush2.msra.mxu0 %v555
    %991 = vmatprep.subr.mxu0 0.0
    %992 = vmatpush2.msra.mxu0 %v554
    %993 = vmatprep.subr.mxu0 0.0
    %994 = vmatpush2.msra.mxu0 %v553
    %995 = vmatprep.mubr.f32.mxu0 %v195
    %996 = vmatmul.mubr.f32.gmra.mxu0 %v192
    %v997 = vpop.f32.mrf.mxu0
    %v998 = vadd.f32 %v928, %v997
    %v999 = vpop.f32.mrf.mxu0
    %1000 = vdwg.mxu0
    %1001 = vmatprep.subr.mxu0 0.0
    %1002 = vmatpush1.msra.mxu0 0.0
    %1003 = vmatprep.subr.mxu0 0.0
    %1004 = vmatpush1.msra.mxu0 0.0
    %1005 = vmatprep.subr.mxu0 0.0
    %1006 = vmatpush1.msra.mxu0 0.0
    %1007 = vmatprep.subr.mxu0 0.0
    %1008 = vmatpush1.msra.mxu0 0.0
    %1009 = vmatprep.subr.mxu0 0.0
    %1010 = vmatpush1.msra.mxu0 0.0
    %1011 = vmatprep.subr.mxu0 0.0
    %1012 = vmatpush1.msra.mxu0 0.0
    %1013 = vmatprep.subr.mxu0 0.0
    %1014 = vmatpush1.msra.mxu0 0.0
    %1015 = vmatprep.subr.mxu0 0.0
    %1016 = vmatpush1.msra.mxu0 0.0
    %1017 = vmatprep.subr.mxu0 0.0
    %1018 = vmatpush1.msra.mxu0 %v576
    %1019 = vmatprep.subr.mxu0 0.0
    %1020 = vmatpush1.msra.mxu0 %v575
    %1021 = vmatprep.subr.mxu0 0.0
    %1022 = vmatpush1.msra.mxu0 %v574
    %1023 = vmatprep.subr.mxu0 0.0
    %1024 = vmatpush1.msra.mxu0 %v573
    %1025 = vmatprep.subr.mxu0 0.0
    %1026 = vmatpush1.msra.mxu0 %v572
    %1027 = vmatprep.subr.mxu0 0.0
    %1028 = vmatpush1.msra.mxu0 %v571
    %1029 = vmatprep.subr.mxu0 0.0
    %1030 = vmatpush1.msra.mxu0 %v570
    %1031 = vmatprep.subr.mxu0 0.0
    %1032 = vmatpush1.msra.mxu0 %v569
    %1033 = vmatprep.subr.mxu0 0.0
    %1034 = vmatpush2.msra.mxu0 0.0
    %1035 = vmatprep.subr.mxu0 0.0
    %1036 = vmatpush2.msra.mxu0 0.0
    %1037 = vmatprep.subr.mxu0 0.0
    %1038 = vmatpush2.msra.mxu0 0.0
    %1039 = vmatprep.subr.mxu0 0.0
    %1040 = vmatpush2.msra.mxu0 0.0
    %1041 = vmatprep.subr.mxu0 0.0
    %1042 = vmatpush2.msra.mxu0 0.0
    %1043 = vmatprep.subr.mxu0 0.0
    %1044 = vmatpush2.msra.mxu0 0.0
    %1045 = vmatprep.subr.mxu0 0.0
    %1046 = vmatpush2.msra.mxu0 0.0
    %1047 = vmatprep.subr.mxu0 0.0
    %1048 = vmatpush2.msra.mxu0 0.0
    %1049 = vmatprep.subr.mxu0 0.0
    %1050 = vmatpush2.msra.mxu0 0.0
    %1051 = vmatprep.subr.mxu0 0.0
    %1052 = vmatpush2.msra.mxu0 0.0
    %1053 = vmatprep.subr.mxu0 0.0
    %1054 = vmatpush2.msra.mxu0 0.0
    %1055 = vmatprep.subr.mxu0 0.0
    %1056 = vmatpush2.msra.mxu0 0.0
    %1057 = vmatprep.subr.mxu0 0.0
    %1058 = vmatpush2.msra.mxu0 0.0
    %1059 = vmatprep.subr.mxu0 0.0
    %1060 = vmatpush2.msra.mxu0 0.0
    %1061 = vmatprep.subr.mxu0 0.0
    %1062 = vmatpush2.msra.mxu0 0.0
    %1063 = vmatprep.subr.mxu0 0.0
    %1064 = vmatpush2.msra.mxu0 0.0
    %1065 = vmatprep.mubr.f32.mxu0 0.0
    %1066 = vmatmul.mubr.f32.gmra.mxu0 %v579
    %v1067 = vpop.f32.mrf.mxu0
    %v1068 = vadd.f32 %v998, %v1067
    %v1069 = vpop.f32.mrf.mxu0
    %1070 = vdwg.mxu0
    %v1072 = vsel %vm577, %v376, 0
    %1074 = vmatprep.subr.mxu0 0.0
    %1075 = vmatpush1.msra.mxu0 %v392
    %1076 = vmatprep.subr.mxu0 0.0
    %1077 = vmatpush1.msra.mxu0 %v391
    %1078 = vmatprep.subr.mxu0 0.0
    %1079 = vmatpush1.msra.mxu0 %v390
    %1080 = vmatprep.subr.mxu0 0.0
    %1081 = vmatpush1.msra.mxu0 %v389
    %1082 = vmatprep.subr.mxu0 0.0
    %1083 = vmatpush1.msra.mxu0 %v388
    %1084 = vmatprep.subr.mxu0 0.0
    %1085 = vmatpush1.msra.mxu0 %v387
    %1086 = vmatprep.subr.mxu0 0.0
    %1087 = vmatpush1.msra.mxu0 %v386
    %1088 = vmatprep.subr.mxu0 0.0
    %1089 = vmatpush1.msra.mxu0 %v385
    %1090 = vmatprep.subr.mxu0 0.0
    %1091 = vmatpush1.msra.mxu0 %v384
    %1092 = vmatprep.subr.mxu0 0.0
    %1093 = vmatpush1.msra.mxu0 %v383
    %1094 = vmatprep.subr.mxu0 0.0
    %1095 = vmatpush1.msra.mxu0 %v382
    %1096 = vmatprep.subr.mxu0 0.0
    %1097 = vmatpush1.msra.mxu0 %v381
    %1098 = vmatprep.subr.mxu0 0.0
    %1099 = vmatpush1.msra.mxu0 %v380
    %1100 = vmatprep.subr.mxu0 0.0
    %1101 = vmatpush1.msra.mxu0 %v379
    %1102 = vmatprep.subr.mxu0 0.0
    %1103 = vmatpush1.msra.mxu0 %v378
    %1104 = vmatprep.subr.mxu0 0.0
    %1105 = vmatpush1.msra.mxu0 %v377
    %1106 = vmatprep.subr.mxu0 0.0
    %1107 = vmatpush2.msra.mxu0 %v408
    %1108 = vmatprep.subr.mxu0 0.0
    %1109 = vmatpush2.msra.mxu0 %v407
    %1110 = vmatprep.subr.mxu0 0.0
    %1111 = vmatpush2.msra.mxu0 %v406
    %1112 = vmatprep.subr.mxu0 0.0
    %1113 = vmatpush2.msra.mxu0 %v405
    %1114 = vmatprep.subr.mxu0 0.0
    %1115 = vmatpush2.msra.mxu0 %v404
    %1116 = vmatprep.subr.mxu0 0.0
    %1117 = vmatpush2.msra.mxu0 %v403
    %1118 = vmatprep.subr.mxu0 0.0
    %1119 = vmatpush2.msra.mxu0 %v402
    %1120 = vmatprep.subr.mxu0 0.0
    %1121 = vmatpush2.msra.mxu0 %v401
    %1122 = vmatprep.subr.mxu0 0.0
    %1123 = vmatpush2.msra.mxu0 %v400
    %1124 = vmatprep.subr.mxu0 0.0
    %1125 = vmatpush2.msra.mxu0 %v399
    %1126 = vmatprep.subr.mxu0 0.0
    %1127 = vmatpush2.msra.mxu0 %v398
    %1128 = vmatprep.subr.mxu0 0.0
    %1129 = vmatpush2.msra.mxu0 %v397
    %1130 = vmatprep.subr.mxu0 0.0
    %1131 = vmatpush2.msra.mxu0 %v396
    %1132 = vmatprep.subr.mxu0 0.0
    %1133 = vmatpush2.msra.mxu0 %v395
    %1134 = vmatprep.subr.mxu0 0.0
    %1135 = vmatpush2.msra.mxu0 %v394
    %1136 = vmatprep.subr.mxu0 0.0
    %1137 = vmatpush2.msra.mxu0 %v393
    %1138 = vmatprep.mubr.f32.mxu0 %v343
    %1139 = vmatmul.mubr.f32.gmra.mxu0 %v340
    %v1140 = vpop.f32.mrf.mxu0
    %v1141 = vadd.f32 0.0, %v1140
    %v1142 = vpop.f32.mrf.mxu0
    %1143 = vdwg.mxu0
    %1144 = vmatprep.subr.mxu0 0.0
    %1145 = vmatpush1.msra.mxu0 %v424
    %1146 = vmatprep.subr.mxu0 0.0
    %1147 = vmatpush1.msra.mxu0 %v423
    %1148 = vmatprep.subr.mxu0 0.0
    %1149 = vmatpush1.msra.mxu0 %v422
    %1150 = vmatprep.subr.mxu0 0.0
    %1151 = vmatpush1.msra.mxu0 %v421
    %1152 = vmatprep.subr.mxu0 0.0
    %1153 = vmatpush1.msra.mxu0 %v420
    %1154 = vmatprep.subr.mxu0 0.0
    %1155 = vmatpush1.msra.mxu0 %v419
    %1156 = vmatprep.subr.mxu0 0.0
    %1157 = vmatpush1.msra.mxu0 %v418
    %1158 = vmatprep.subr.mxu0 0.0
    %1159 = vmatpush1.msra.mxu0 %v417
    %1160 = vmatprep.subr.mxu0 0.0
    %1161 = vmatpush1.msra.mxu0 %v416
    %1162 = vmatprep.subr.mxu0 0.0
    %1163 = vmatpush1.msra.mxu0 %v415
    %1164 = vmatprep.subr.mxu0 0.0
    %1165 = vmatpush1.msra.mxu0 %v414
    %1166 = vmatprep.subr.mxu0 0.0
    %1167 = vmatpush1.msra.mxu0 %v413
    %1168 = vmatprep.subr.mxu0 0.0
    %1169 = vmatpush1.msra.mxu0 %v412
    %1170 = vmatprep.subr.mxu0 0.0
    %1171 = vmatpush1.msra.mxu0 %v411
    %1172 = vmatprep.subr.mxu0 0.0
    %1173 = vmatpush1.msra.mxu0 %v410
    %1174 = vmatprep.subr.mxu0 0.0
    %1175 = vmatpush1.msra.mxu0 %v409
    %1176 = vmatprep.subr.mxu0 0.0
    %1177 = vmatpush2.msra.mxu0 %v440
    %1178 = vmatprep.subr.mxu0 0.0
    %1179 = vmatpush2.msra.mxu0 %v439
    %1180 = vmatprep.subr.mxu0 0.0
    %1181 = vmatpush2.msra.mxu0 %v438
    %1182 = vmatprep.subr.mxu0 0.0
    %1183 = vmatpush2.msra.mxu0 %v437
    %1184 = vmatprep.subr.mxu0 0.0
    %1185 = vmatpush2.msra.mxu0 %v436
    %1186 = vmatprep.subr.mxu0 0.0
    %1187 = vmatpush2.msra.mxu0 %v435
    %1188 = vmatprep.subr.mxu0 0.0
    %1189 = vmatpush2.msra.mxu0 %v434
    %1190 = vmatprep.subr.mxu0 0.0
    %1191 = vmatpush2.msra.mxu0 %v433
    %1192 = vmatprep.subr.mxu0 0.0
    %1193 = vmatpush2.msra.mxu0 %v432
    %1194 = vmatprep.subr.mxu0 0.0
    %1195 = vmatpush2.msra.mxu0 %v431
    %1196 = vmatprep.subr.mxu0 0.0
    %1197 = vmatpush2.msra.mxu0 %v430
    %1198 = vmatprep.subr.mxu0 0.0
    %1199 = vmatpush2.msra.mxu0 %v429
    %1200 = vmatprep.subr.mxu0 0.0
    %1201 = vmatpush2.msra.mxu0 %v428
    %1202 = vmatprep.subr.mxu0 0.0
    %1203 = vmatpush2.msra.mxu0 %v427
    %1204 = vmatprep.subr.mxu0 0.0
    %1205 = vmatpush2.msra.mxu0 %v426
    %1206 = vmatprep.subr.mxu0 0.0
    %1207 = vmatpush2.msra.mxu0 %v425
    %1208 = vmatprep.mubr.f32.mxu0 %v349
    %1209 = vmatmul.mubr.f32.gmra.mxu0 %v346
    %v1210 = vpop.f32.mrf.mxu0
    %v1211 = vadd.f32 %v1141, %v1210
    %v1212 = vpop.f32.mrf.mxu0
    %1213 = vdwg.mxu0
    %1214 = vmatprep.subr.mxu0 0.0
    %1215 = vmatpush1.msra.mxu0 %v456
    %1216 = vmatprep.subr.mxu0 0.0
    %1217 = vmatpush1.msra.mxu0 %v455
    %1218 = vmatprep.subr.mxu0 0.0
    %1219 = vmatpush1.msra.mxu0 %v454
    %1220 = vmatprep.subr.mxu0 0.0
    %1221 = vmatpush1.msra.mxu0 %v453
    %1222 = vmatprep.subr.mxu0 0.0
    %1223 = vmatpush1.msra.mxu0 %v452
    %1224 = vmatprep.subr.mxu0 0.0
    %1225 = vmatpush1.msra.mxu0 %v451
    %1226 = vmatprep.subr.mxu0 0.0
    %1227 = vmatpush1.msra.mxu0 %v450
    %1228 = vmatprep.subr.mxu0 0.0
    %1229 = vmatpush1.msra.mxu0 %v449
    %1230 = vmatprep.subr.mxu0 0.0
    %1231 = vmatpush1.msra.mxu0 %v448
    %1232 = vmatprep.subr.mxu0 0.0
    %1233 = vmatpush1.msra.mxu0 %v447
    %1234 = vmatprep.subr.mxu0 0.0
    %1235 = vmatpush1.msra.mxu0 %v446
    %1236 = vmatprep.subr.mxu0 0.0
    %1237 = vmatpush1.msra.mxu0 %v445
    %1238 = vmatprep.subr.mxu0 0.0
    %1239 = vmatpush1.msra.mxu0 %v444
    %1240 = vmatprep.subr.mxu0 0.0
    %1241 = vmatpush1.msra.mxu0 %v443
    %1242 = vmatprep.subr.mxu0 0.0
    %1243 = vmatpush1.msra.mxu0 %v442
    %1244 = vmatprep.subr.mxu0 0.0
    %1245 = vmatpush1.msra.mxu0 %v441
    %1246 = vmatprep.subr.mxu0 0.0
    %1247 = vmatpush2.msra.mxu0 %v472
    %1248 = vmatprep.subr.mxu0 0.0
    %1249 = vmatpush2.msra.mxu0 %v471
    %1250 = vmatprep.subr.mxu0 0.0
    %1251 = vmatpush2.msra.mxu0 %v470
    %1252 = vmatprep.subr.mxu0 0.0
    %1253 = vmatpush2.msra.mxu0 %v469
    %1254 = vmatprep.subr.mxu0 0.0
    %1255 = vmatpush2.msra.mxu0 %v468
    %1256 = vmatprep.subr.mxu0 0.0
    %1257 = vmatpush2.msra.mxu0 %v467
    %1258 = vmatprep.subr.mxu0 0.0
    %1259 = vmatpush2.msra.mxu0 %v466
    %1260 = vmatprep.subr.mxu0 0.0
    %1261 = vmatpush2.msra.mxu0 %v465
    %1262 = vmatprep.subr.mxu0 0.0
    %1263 = vmatpush2.msra.mxu0 %v464
    %1264 = vmatprep.subr.mxu0 0.0
    %1265 = vmatpush2.msra.mxu0 %v463
    %1266 = vmatprep.subr.mxu0 0.0
    %1267 = vmatpush2.msra.mxu0 %v462
    %1268 = vmatprep.subr.mxu0 0.0
    %1269 = vmatpush2.msra.mxu0 %v461
    %1270 = vmatprep.subr.mxu0 0.0
    %1271 = vmatpush2.msra.mxu0 %v460
    %1272 = vmatprep.subr.mxu0 0.0
    %1273 = vmatpush2.msra.mxu0 %v459
    %1274 = vmatprep.subr.mxu0 0.0
    %1275 = vmatpush2.msra.mxu0 %v458
    %1276 = vmatprep.subr.mxu0 0.0
    %1277 = vmatpush2.msra.mxu0 %v457
    %1278 = vmatprep.mubr.f32.mxu0 %v355
    %1279 = vmatmul.mubr.f32.gmra.mxu0 %v352
    %v1280 = vpop.f32.mrf.mxu0
    %v1281 = vadd.f32 %v1211, %v1280
    %v1282 = vpop.f32.mrf.mxu0
    %1283 = vdwg.mxu0
    %1284 = vmatprep.subr.mxu0 0.0
    %1285 = vmatpush1.msra.mxu0 %v488
    %1286 = vmatprep.subr.mxu0 0.0
    %1287 = vmatpush1.msra.mxu0 %v487
    %1288 = vmatprep.subr.mxu0 0.0
    %1289 = vmatpush1.msra.mxu0 %v486
    %1290 = vmatprep.subr.mxu0 0.0
    %1291 = vmatpush1.msra.mxu0 %v485
    %1292 = vmatprep.subr.mxu0 0.0
    %1293 = vmatpush1.msra.mxu0 %v484
    %1294 = vmatprep.subr.mxu0 0.0
    %1295 = vmatpush1.msra.mxu0 %v483
    %1296 = vmatprep.subr.mxu0 0.0
    %1297 = vmatpush1.msra.mxu0 %v482
    %1298 = vmatprep.subr.mxu0 0.0
    %1299 = vmatpush1.msra.mxu0 %v481
    %1300 = vmatprep.subr.mxu0 0.0
    %1301 = vmatpush1.msra.mxu0 %v480
    %1302 = vmatprep.subr.mxu0 0.0
    %1303 = vmatpush1.msra.mxu0 %v479
    %1304 = vmatprep.subr.mxu0 0.0
    %1305 = vmatpush1.msra.mxu0 %v478
    %1306 = vmatprep.subr.mxu0 0.0
    %1307 = vmatpush1.msra.mxu0 %v477
    %1308 = vmatprep.subr.mxu0 0.0
    %1309 = vmatpush1.msra.mxu0 %v476
    %1310 = vmatprep.subr.mxu0 0.0
    %1311 = vmatpush1.msra.mxu0 %v475
    %1312 = vmatprep.subr.mxu0 0.0
    %1313 = vmatpush1.msra.mxu0 %v474
    %1314 = vmatprep.subr.mxu0 0.0
    %1315 = vmatpush1.msra.mxu0 %v473
    %1316 = vmatprep.subr.mxu0 0.0
    %1317 = vmatpush2.msra.mxu0 %v504
    %1318 = vmatprep.subr.mxu0 0.0
    %1319 = vmatpush2.msra.mxu0 %v503
    %1320 = vmatprep.subr.mxu0 0.0
    %1321 = vmatpush2.msra.mxu0 %v502
    %1322 = vmatprep.subr.mxu0 0.0
    %1323 = vmatpush2.msra.mxu0 %v501
    %1324 = vmatprep.subr.mxu0 0.0
    %1325 = vmatpush2.msra.mxu0 %v500
    %1326 = vmatprep.subr.mxu0 0.0
    %1327 = vmatpush2.msra.mxu0 %v499
    %1328 = vmatprep.subr.mxu0 0.0
    %1329 = vmatpush2.msra.mxu0 %v498
    %1330 = vmatprep.subr.mxu0 0.0
    %1331 = vmatpush2.msra.mxu0 %v497
    %1332 = vmatprep.subr.mxu0 0.0
    %1333 = vmatpush2.msra.mxu0 %v496
    %1334 = vmatprep.subr.mxu0 0.0
    %1335 = vmatpush2.msra.mxu0 %v495
    %1336 = vmatprep.subr.mxu0 0.0
    %1337 = vmatpush2.msra.mxu0 %v494
    %1338 = vmatprep.subr.mxu0 0.0
    %1339 = vmatpush2.msra.mxu0 %v493
    %1340 = vmatprep.subr.mxu0 0.0
    %1341 = vmatpush2.msra.mxu0 %v492
    %1342 = vmatprep.subr.mxu0 0.0
    %1343 = vmatpush2.msra.mxu0 %v491
    %1344 = vmatprep.subr.mxu0 0.0
    %1345 = vmatpush2.msra.mxu0 %v490
    %1346 = vmatprep.subr.mxu0 0.0
    %1347 = vmatpush2.msra.mxu0 %v489
    %1348 = vmatprep.mubr.f32.mxu0 %v361
    %1349 = vmatmul.mubr.f32.gmra.mxu0 %v358
    %v1350 = vpop.f32.mrf.mxu0
    %v1351 = vadd.f32 %v1281, %v1350
    %v1352 = vpop.f32.mrf.mxu0
    %1353 = vdwg.mxu0
    %1354 = vmatprep.subr.mxu0 0.0
    %1355 = vmatpush1.msra.mxu0 %v520
    %1356 = vmatprep.subr.mxu0 0.0
    %1357 = vmatpush1.msra.mxu0 %v519
    %1358 = vmatprep.subr.mxu0 0.0
    %1359 = vmatpush1.msra.mxu0 %v518
    %1360 = vmatprep.subr.mxu0 0.0
    %1361 = vmatpush1.msra.mxu0 %v517
    %1362 = vmatprep.subr.mxu0 0.0
    %1363 = vmatpush1.msra.mxu0 %v516
    %1364 = vmatprep.subr.mxu0 0.0
    %1365 = vmatpush1.msra.mxu0 %v515
    %1366 = vmatprep.subr.mxu0 0.0
    %1367 = vmatpush1.msra.mxu0 %v514
    %1368 = vmatprep.subr.mxu0 0.0
    %1369 = vmatpush1.msra.mxu0 %v513
    %1370 = vmatprep.subr.mxu0 0.0
    %1371 = vmatpush1.msra.mxu0 %v512
    %1372 = vmatprep.subr.mxu0 0.0
    %1373 = vmatpush1.msra.mxu0 %v511
    %1374 = vmatprep.subr.mxu0 0.0
    %1375 = vmatpush1.msra.mxu0 %v510
    %1376 = vmatprep.subr.mxu0 0.0
    %1377 = vmatpush1.msra.mxu0 %v509
    %1378 = vmatprep.subr.mxu0 0.0
    %1379 = vmatpush1.msra.mxu0 %v508
    %1380 = vmatprep.subr.mxu0 0.0
    %1381 = vmatpush1.msra.mxu0 %v507
    %1382 = vmatprep.subr.mxu0 0.0
    %1383 = vmatpush1.msra.mxu0 %v506
    %1384 = vmatprep.subr.mxu0 0.0
    %1385 = vmatpush1.msra.mxu0 %v505
    %1386 = vmatprep.subr.mxu0 0.0
    %1387 = vmatpush2.msra.mxu0 %v536
    %1388 = vmatprep.subr.mxu0 0.0
    %1389 = vmatpush2.msra.mxu0 %v535
    %1390 = vmatprep.subr.mxu0 0.0
    %1391 = vmatpush2.msra.mxu0 %v534
    %1392 = vmatprep.subr.mxu0 0.0
    %1393 = vmatpush2.msra.mxu0 %v533
    %1394 = vmatprep.subr.mxu0 0.0
    %1395 = vmatpush2.msra.mxu0 %v532
    %1396 = vmatprep.subr.mxu0 0.0
    %1397 = vmatpush2.msra.mxu0 %v531
    %1398 = vmatprep.subr.mxu0 0.0
    %1399 = vmatpush2.msra.mxu0 %v530
    %1400 = vmatprep.subr.mxu0 0.0
    %1401 = vmatpush2.msra.mxu0 %v529
    %1402 = vmatprep.subr.mxu0 0.0
    %1403 = vmatpush2.msra.mxu0 %v528
    %1404 = vmatprep.subr.mxu0 0.0
    %1405 = vmatpush2.msra.mxu0 %v527
    %1406 = vmatprep.subr.mxu0 0.0
    %1407 = vmatpush2.msra.mxu0 %v526
    %1408 = vmatprep.subr.mxu0 0.0
    %1409 = vmatpush2.msra.mxu0 %v525
    %1410 = vmatprep.subr.mxu0 0.0
    %1411 = vmatpush2.msra.mxu0 %v524
    %1412 = vmatprep.subr.mxu0 0.0
    %1413 = vmatpush2.msra.mxu0 %v523
    %1414 = vmatprep.subr.mxu0 0.0
    %1415 = vmatpush2.msra.mxu0 %v522
    %1416 = vmatprep.subr.mxu0 0.0
    %1417 = vmatpush2.msra.mxu0 %v521
    %1418 = vmatprep.mubr.f32.mxu0 %v367
    %1419 = vmatmul.mubr.f32.gmra.mxu0 %v364
    %v1420 = vpop.f32.mrf.mxu0
    %v1421 = vadd.f32 %v1351, %v1420
    %v1422 = vpop.f32.mrf.mxu0
    %1423 = vdwg.mxu0
    %1424 = vmatprep.subr.mxu0 0.0
    %1425 = vmatpush1.msra.mxu0 %v552
    %1426 = vmatprep.subr.mxu0 0.0
    %1427 = vmatpush1.msra.mxu0 %v551
    %1428 = vmatprep.subr.mxu0 0.0
    %1429 = vmatpush1.msra.mxu0 %v550
    %1430 = vmatprep.subr.mxu0 0.0
    %1431 = vmatpush1.msra.mxu0 %v549
    %1432 = vmatprep.subr.mxu0 0.0
    %1433 = vmatpush1.msra.mxu0 %v548
    %1434 = vmatprep.subr.mxu0 0.0
    %1435 = vmatpush1.msra.mxu0 %v547
    %1436 = vmatprep.subr.mxu0 0.0
    %1437 = vmatpush1.msra.mxu0 %v546
    %1438 = vmatprep.subr.mxu0 0.0
    %1439 = vmatpush1.msra.mxu0 %v545
    %1440 = vmatprep.subr.mxu0 0.0
    %1441 = vmatpush1.msra.mxu0 %v544
    %1442 = vmatprep.subr.mxu0 0.0
    %1443 = vmatpush1.msra.mxu0 %v543
    %1444 = vmatprep.subr.mxu0 0.0
    %1445 = vmatpush1.msra.mxu0 %v542
    %1446 = vmatprep.subr.mxu0 0.0
    %1447 = vmatpush1.msra.mxu0 %v541
    %1448 = vmatprep.subr.mxu0 0.0
    %1449 = vmatpush1.msra.mxu0 %v540
    %1450 = vmatprep.subr.mxu0 0.0
    %1451 = vmatpush1.msra.mxu0 %v539
    %1452 = vmatprep.subr.mxu0 0.0
    %1453 = vmatpush1.msra.mxu0 %v538
    %1454 = vmatprep.subr.mxu0 0.0
    %1455 = vmatpush1.msra.mxu0 %v537
    %1456 = vmatprep.subr.mxu0 0.0
    %1457 = vmatpush2.msra.mxu0 %v568
    %1458 = vmatprep.subr.mxu0 0.0
    %1459 = vmatpush2.msra.mxu0 %v567
    %1460 = vmatprep.subr.mxu0 0.0
    %1461 = vmatpush2.msra.mxu0 %v566
    %1462 = vmatprep.subr.mxu0 0.0
    %1463 = vmatpush2.msra.mxu0 %v565
    %1464 = vmatprep.subr.mxu0 0.0
    %1465 = vmatpush2.msra.mxu0 %v564
    %1466 = vmatprep.subr.mxu0 0.0
    %1467 = vmatpush2.msra.mxu0 %v563
    %1468 = vmatprep.subr.mxu0 0.0
    %1469 = vmatpush2.msra.mxu0 %v562
    %1470 = vmatprep.subr.mxu0 0.0
    %1471 = vmatpush2.msra.mxu0 %v561
    %1472 = vmatprep.subr.mxu0 0.0
    %1473 = vmatpush2.msra.mxu0 %v560
    %1474 = vmatprep.subr.mxu0 0.0
    %1475 = vmatpush2.msra.mxu0 %v559
    %1476 = vmatprep.subr.mxu0 0.0
    %1477 = vmatpush2.msra.mxu0 %v558
    %1478 = vmatprep.subr.mxu0 0.0
    %1479 = vmatpush2.msra.mxu0 %v557
    %1480 = vmatprep.subr.mxu0 0.0
    %1481 = vmatpush2.msra.mxu0 %v556
    %1482 = vmatprep.subr.mxu0 0.0
    %1483 = vmatpush2.msra.mxu0 %v555
    %1484 = vmatprep.subr.mxu0 0.0
    %1485 = vmatpush2.msra.mxu0 %v554
    %1486 = vmatprep.subr.mxu0 0.0
    %1487 = vmatpush2.msra.mxu0 %v553
    %1488 = vmatprep.mubr.f32.mxu0 %v373
    %1489 = vmatmul.mubr.f32.gmra.mxu0 %v370
    %v1490 = vpop.f32.mrf.mxu0
    %v1491 = vadd.f32 %v1421, %v1490
    %v1492 = vpop.f32.mrf.mxu0
    %1493 = vdwg.mxu0
    %1494 = vmatprep.subr.mxu0 0.0
    %1495 = vmatpush1.msra.mxu0 0.0
    %1496 = vmatprep.subr.mxu0 0.0
    %1497 = vmatpush1.msra.mxu0 0.0
    %1498 = vmatprep.subr.mxu0 0.0
    %1499 = vmatpush1.msra.mxu0 0.0
    %1500 = vmatprep.subr.mxu0 0.0
    %1501 = vmatpush1.msra.mxu0 0.0
    %1502 = vmatprep.subr.mxu0 0.0
    %1503 = vmatpush1.msra.mxu0 0.0
    %1504 = vmatprep.subr.mxu0 0.0
    %1505 = vmatpush1.msra.mxu0 0.0
    %1506 = vmatprep.subr.mxu0 0.0
    %1507 = vmatpush1.msra.mxu0 0.0
    %1508 = vmatprep.subr.mxu0 0.0
    %1509 = vmatpush1.msra.mxu0 0.0
    %1510 = vmatprep.subr.mxu0 0.0
    %1511 = vmatpush1.msra.mxu0 %v576
    %1512 = vmatprep.subr.mxu0 0.0
    %1513 = vmatpush1.msra.mxu0 %v575
    %1514 = vmatprep.subr.mxu0 0.0
    %1515 = vmatpush1.msra.mxu0 %v574
    %1516 = vmatprep.subr.mxu0 0.0
    %1517 = vmatpush1.msra.mxu0 %v573
    %1518 = vmatprep.subr.mxu0 0.0
    %1519 = vmatpush1.msra.mxu0 %v572
    %1520 = vmatprep.subr.mxu0 0.0
    %1521 = vmatpush1.msra.mxu0 %v571
    %1522 = vmatprep.subr.mxu0 0.0
    %1523 = vmatpush1.msra.mxu0 %v570
    %1524 = vmatprep.subr.mxu0 0.0
    %1525 = vmatpush1.msra.mxu0 %v569
    %1526 = vmatprep.subr.mxu0 0.0
    %1527 = vmatpush2.msra.mxu0 0.0
    %1528 = vmatprep.subr.mxu0 0.0
    %1529 = vmatpush2.msra.mxu0 0.0
    %1530 = vmatprep.subr.mxu0 0.0
    %1531 = vmatpush2.msra.mxu0 0.0
    %1532 = vmatprep.subr.mxu0 0.0
    %1533 = vmatpush2.msra.mxu0 0.0
    %1534 = vmatprep.subr.mxu0 0.0
    %1535 = vmatpush2.msra.mxu0 0.0
    %1536 = vmatprep.subr.mxu0 0.0
    %1537 = vmatpush2.msra.mxu0 0.0
    %1538 = vmatprep.subr.mxu0 0.0
    %1539 = vmatpush2.msra.mxu0 0.0
    %1540 = vmatprep.subr.mxu0 0.0
    %1541 = vmatpush2.msra.mxu0 0.0
    %1542 = vmatprep.subr.mxu0 0.0
    %1543 = vmatpush2.msra.mxu0 0.0
    %1544 = vmatprep.subr.mxu0 0.0
    %1545 = vmatpush2.msra.mxu0 0.0
    %1546 = vmatprep.subr.mxu0 0.0
    %1547 = vmatpush2.msra.mxu0 0.0
    %1548 = vmatprep.subr.mxu0 0.0
    %1549 = vmatpush2.msra.mxu0 0.0
    %1550 = vmatprep.subr.mxu0 0.0
    %1551 = vmatpush2.msra.mxu0 0.0
    %1552 = vmatprep.subr.mxu0 0.0
    %1553 = vmatpush2.msra.mxu0 0.0
    %1554 = vmatprep.subr.mxu0 0.0
    %1555 = vmatpush2.msra.mxu0 0.0
    %1556 = vmatprep.subr.mxu0 0.0
    %1557 = vmatpush2.msra.mxu0 0.0
    %1558 = vmatprep.mubr.f32.mxu0 0.0
    %1559 = vmatmul.mubr.f32.gmra.mxu0 %v1072
    %v1560 = vpop.f32.mrf.mxu0
    %v1561 = vadd.f32 %v1491, %v1560
    %v1562 = vpop.f32.mrf.mxu0
    %1563 = vdwg.mxu0
    %v1564 = vmul.f32 %v1068, 0.03125
    %v1565 = vmul.f32 %v1561, 0.03125
    %v1566 = vmul.f32 %v1564, %v1564
    %v1567 = vsub.f32 %v1565, %v1566
    %v1568 = vmax.f32 %v1567, 0.0
    %v1569 = vld [vmem:[%s1] sm:$0x1]
    %v1570 = vadd.f32 %v1568, 1e-05
    %v1571 = vrsqrt.pop %v1570
    %v1572 = vmul.f32 %v1569, %v1571
    %v1573 = vld [vmem:[%s2] sm:$0x1]
    %v1574 = vmul.f32 %v1564, %v1572
    %v1575 = vsub.f32 %v1573, %v1574
    %v1576 = vld [vmem:[%s4] sm:$0xff]
    %v1577 = vld [vmem:[%s4 + $0x8] sm:$0xff]
    %v1578 = vld [vmem:[%s4 + $0x10] sm:$0xff]
    %v1579 = vld [vmem:[%s4 + $0x18] sm:$0xff]
    %v1580 = vld [vmem:[%s4 + $0x20] sm:$0xff]
    %v1581 = vld [vmem:[%s4 + $0x28] sm:$0xff]
    %v1582 = vld [vmem:[%s4 + $0x30] sm:$0xff]
    %v1583 = vld [vmem:[%s4 + $0x38] sm:$0xff]
    %v1584 = vld [vmem:[%s4 + $0x40] sm:$0xff]
    %v1585 = vld [vmem:[%s4 + $0x48] sm:$0xff]
    %v1586 = vld [vmem:[%s4 + $0x50] sm:$0xff]
    %v1587 = vld [vmem:[%s4 + $0x58] sm:$0xff]
    %v1588 = vld [vmem:[%s4 + $0x60] sm:$0xff]
    %v1589 = vld [vmem:[%s4 + $0x68] sm:$0xff]
    %v1590 = vld [vmem:[%s4 + $0x70] sm:$0xff]
    %v1591 = vld [vmem:[%s4 + $0x78] sm:$0xff]
    %v1592 = vld [vmem:[%s4 + $0x80] sm:$0xff]
    %v1593 = vld [vmem:[%s4 + $0x88] sm:$0xff]
    %v1594 = vld [vmem:[%s4 + $0x90] sm:$0xff]
    %v1595 = vld [vmem:[%s4 + $0x98] sm:$0xff]
    %v1596 = vld [vmem:[%s4 + $0xa0] sm:$0xff]
    %v1597 = vld [vmem:[%s4 + $0xa8] sm:$0xff]
    %v1598 = vld [vmem:[%s4 + $0xb0] sm:$0xff]
    %v1599 = vld [vmem:[%s4 + $0xb8] sm:$0xff]
    %v1600 = vld [vmem:[%s4 + $0xc0] sm:$0xff]
    %v1601 = vld [vmem:[%s4 + $0xc8] sm:$0xff]
    %v1602 = vld [vmem:[%s4 + $0xd0] sm:$0xff]
    %v1603 = vld [vmem:[%s4 + $0xd8] sm:$0xff]
    %v1604 = vld [vmem:[%s4 + $0xe0] sm:$0xff]
    %v1605 = vld [vmem:[%s4 + $0xe8] sm:$0xff]
    %v1606 = vld [vmem:[%s4 + $0xf0] sm:$0xff]
    %v1607 = vld [vmem:[%s4 + $0xf8] sm:$0xff]
    %v1608 = vld [vmem:[%s4 + $0x100] sm:$0xff]
    %v1609 = vld [vmem:[%s4 + $0x108] sm:$0xff]
    %v1610 = vld [vmem:[%s4 + $0x110] sm:$0xff]
    %v1611 = vld [vmem:[%s4 + $0x118] sm:$0xff]
    %v1612 = vld [vmem:[%s4 + $0x120] sm:$0xff]
    %v1613 = vld [vmem:[%s4 + $0x128] sm:$0xff]
    %v1614 = vld [vmem:[%s4 + $0x130] sm:$0xff]
    %v1615 = vld [vmem:[%s4 + $0x138] sm:$0xff]
    %v1616 = vld [vmem:[%s4 + $0x140] sm:$0xff]
    %v1617 = vld [vmem:[%s4 + $0x148] sm:$0xff]
    %v1618 = vld [vmem:[%s4 + $0x150] sm:$0xff]
    %v1619 = vld [vmem:[%s4 + $0x158] sm:$0xff]
    %v1620 = vld [vmem:[%s4 + $0x160] sm:$0xff]
    %v1621 = vld [vmem:[%s4 + $0x168] sm:$0xff]
    %v1622 = vld [vmem:[%s4 + $0x170] sm:$0xff]
    %v1623 = vld [vmem:[%s4 + $0x178] sm:$0xff]
    %v1624 = vld [vmem:[%s4 + $0x180] sm:$0xff]
    %v1625 = vld [vmem:[%s4 + $0x188] sm:$0xff]
    %v1626 = vld [vmem:[%s4 + $0x190] sm:$0xff]
    %v1627 = vld [vmem:[%s4 + $0x198] sm:$0xff]
    %v1628 = vld [vmem:[%s4 + $0x1a0] sm:$0xff]
    %v1629 = vld [vmem:[%s4 + $0x1a8] sm:$0xff]
    %v1630 = vld [vmem:[%s4 + $0x1b0] sm:$0xff]
    %v1631 = vld [vmem:[%s4 + $0x1b8] sm:$0xff]
    %v1632 = vld [vmem:[%s4 + $0x1c0] sm:$0xff]
    %v1633 = vld [vmem:[%s4 + $0x1c8] sm:$0xff]
    %v1634 = vld [vmem:[%s4 + $0x1d0] sm:$0xff]
    %v1635 = vld [vmem:[%s4 + $0x1d8] sm:$0xff]
    %v1636 = vld [vmem:[%s4 + $0x1e0] sm:$0xff]
    %v1637 = vld [vmem:[%s4 + $0x1e8] sm:$0xff]
    %v1638 = vld [vmem:[%s4 + $0x1f0] sm:$0xff]
    %v1639 = vld [vmem:[%s4 + $0x1f8] sm:$0xff]
    %v1640 = vld [vmem:[%s4 + $0x200] sm:$0xff]
    %v1641 = vld [vmem:[%s4 + $0x208] sm:$0xff]
    %v1642 = vld [vmem:[%s4 + $0x210] sm:$0xff]
    %v1643 = vld [vmem:[%s4 + $0x218] sm:$0xff]
    %v1644 = vld [vmem:[%s4 + $0x220] sm:$0xff]
    %v1645 = vld [vmem:[%s4 + $0x228] sm:$0xff]
    %v1646 = vld [vmem:[%s4 + $0x230] sm:$0xff]
    %v1647 = vld [vmem:[%s4 + $0x238] sm:$0xff]
    %v1648 = vld [vmem:[%s4 + $0x240] sm:$0xff]
    %v1649 = vld [vmem:[%s4 + $0x248] sm:$0xff]
    %v1650 = vld [vmem:[%s4 + $0x250] sm:$0xff]
    %v1651 = vld [vmem:[%s4 + $0x258] sm:$0xff]
    %v1652 = vld [vmem:[%s4 + $0x260] sm:$0xff]
    %v1653 = vld [vmem:[%s4 + $0x268] sm:$0xff]
    %v1654 = vld [vmem:[%s4 + $0x270] sm:$0xff]
    %v1655 = vld [vmem:[%s4 + $0x278] sm:$0xff]
    %v1656 = vld [vmem:[%s4 + $0x280] sm:$0xff]
    %v1657 = vld [vmem:[%s4 + $0x288] sm:$0xff]
    %v1658 = vld [vmem:[%s4 + $0x290] sm:$0xff]
    %v1659 = vld [vmem:[%s4 + $0x298] sm:$0xff]
    %v1660 = vld [vmem:[%s4 + $0x2a0] sm:$0xff]
    %v1661 = vld [vmem:[%s4 + $0x2a8] sm:$0xff]
    %v1662 = vld [vmem:[%s4 + $0x2b0] sm:$0xff]
    %v1663 = vld [vmem:[%s4 + $0x2b8] sm:$0xff]
    %v1664 = vld [vmem:[%s4 + $0x2c0] sm:$0xff]
    %v1665 = vld [vmem:[%s4 + $0x2c8] sm:$0xff]
    %v1666 = vld [vmem:[%s4 + $0x2d0] sm:$0xff]
    %v1667 = vld [vmem:[%s4 + $0x2d8] sm:$0xff]
    %v1668 = vld [vmem:[%s4 + $0x2e0] sm:$0xff]
    %v1669 = vld [vmem:[%s4 + $0x2e8] sm:$0xff]
    %v1670 = vld [vmem:[%s4 + $0x2f0] sm:$0xff]
    %v1671 = vld [vmem:[%s4 + $0x2f8] sm:$0xff]
    %v1672 = vld [vmem:[%s4 + $0x300] sm:$0xff]
    %v1673 = vld [vmem:[%s4 + $0x308] sm:$0xff]
    %v1674 = vld [vmem:[%s4 + $0x310] sm:$0xff]
    %v1675 = vld [vmem:[%s4 + $0x318] sm:$0xff]
    %v1676 = vld [vmem:[%s4 + $0x320] sm:$0xff]
    %v1677 = vld [vmem:[%s4 + $0x328] sm:$0xff]
    %v1678 = vld [vmem:[%s4 + $0x330] sm:$0xff]
    %v1679 = vld [vmem:[%s4 + $0x338] sm:$0xff]
    %v1680 = vld [vmem:[%s4 + $0x340] sm:$0xff]
    %v1681 = vld [vmem:[%s4 + $0x348] sm:$0xff]
    %v1682 = vld [vmem:[%s4 + $0x350] sm:$0xff]
    %v1683 = vld [vmem:[%s4 + $0x358] sm:$0xff]
    %v1684 = vld [vmem:[%s4 + $0x360] sm:$0xff]
    %v1685 = vld [vmem:[%s4 + $0x368] sm:$0xff]
    %v1686 = vld [vmem:[%s4 + $0x370] sm:$0xff]
    %v1687 = vld [vmem:[%s4 + $0x378] sm:$0xff]
    %v1688 = vld [vmem:[%s4 + $0x380] sm:$0xff]
    %v1689 = vld [vmem:[%s4 + $0x388] sm:$0xff]
    %v1690 = vld [vmem:[%s4 + $0x390] sm:$0xff]
    %v1691 = vld [vmem:[%s4 + $0x398] sm:$0xff]
    %v1692 = vld [vmem:[%s4 + $0x3a0] sm:$0xff]
    %v1693 = vld [vmem:[%s4 + $0x3a8] sm:$0xff]
    %v1694 = vld [vmem:[%s4 + $0x3b0] sm:$0xff]
    %v1695 = vld [vmem:[%s4 + $0x3b8] sm:$0xff]
    %v1696 = vld [vmem:[%s4 + $0x3c0] sm:$0xff]
    %v1697 = vld [vmem:[%s4 + $0x3c8] sm:$0xff]
    %v1698 = vld [vmem:[%s4 + $0x3d0] sm:$0xff]
    %v1699 = vld [vmem:[%s4 + $0x3d8] sm:$0xff]
    %v1700 = vld [vmem:[%s4 + $0x3e0] sm:$0xff]
    %v1701 = vld [vmem:[%s4 + $0x3e8] sm:$0xff]
    %v1702 = vld [vmem:[%s4 + $0x3f0] sm:$0xff]
    %v1703 = vld [vmem:[%s4 + $0x3f8] sm:$0xff]
    %v1704 = vld [vmem:[%s4 + $0x400] sm:$0xff]
    %v1705 = vld [vmem:[%s4 + $0x408] sm:$0xff]
    %v1706 = vld [vmem:[%s4 + $0x410] sm:$0xff]
    %v1707 = vld [vmem:[%s4 + $0x418] sm:$0xff]
    %v1708 = vld [vmem:[%s4 + $0x420] sm:$0xff]
    %v1709 = vld [vmem:[%s4 + $0x428] sm:$0xff]
    %v1710 = vld [vmem:[%s4 + $0x430] sm:$0xff]
    %v1711 = vld [vmem:[%s4 + $0x438] sm:$0xff]
    %v1712 = vld [vmem:[%s4 + $0x440] sm:$0xff]
    %v1713 = vld [vmem:[%s4 + $0x448] sm:$0xff]
    %v1714 = vld [vmem:[%s4 + $0x450] sm:$0xff]
    %v1715 = vld [vmem:[%s4 + $0x458] sm:$0xff]
    %v1716 = vld [vmem:[%s4 + $0x460] sm:$0xff]
    %v1717 = vld [vmem:[%s4 + $0x468] sm:$0xff]
    %v1718 = vld [vmem:[%s4 + $0x470] sm:$0xff]
    %v1719 = vld [vmem:[%s4 + $0x478] sm:$0xff]
    %v1720 = vld [vmem:[%s4 + $0x480] sm:$0xff]
    %v1721 = vld [vmem:[%s4 + $0x488] sm:$0xff]
    %v1722 = vld [vmem:[%s4 + $0x490] sm:$0xff]
    %v1723 = vld [vmem:[%s4 + $0x498] sm:$0xff]
    %v1724 = vld [vmem:[%s4 + $0x4a0] sm:$0xff]
    %v1725 = vld [vmem:[%s4 + $0x4a8] sm:$0xff]
    %v1726 = vld [vmem:[%s4 + $0x4b0] sm:$0xff]
    %v1727 = vld [vmem:[%s4 + $0x4b8] sm:$0xff]
    %v1728 = vld [vmem:[%s4 + $0x4c0] sm:$0xff]
    %v1729 = vld [vmem:[%s4 + $0x4c8] sm:$0xff]
    %v1730 = vld [vmem:[%s4 + $0x4d0] sm:$0xff]
    %v1731 = vld [vmem:[%s4 + $0x4d8] sm:$0xff]
    %v1732 = vld [vmem:[%s4 + $0x4e0] sm:$0xf]
    %v1733 = vld [vmem:[%s4 + $0x4e8] sm:$0xf]
    %v1734 = vld [vmem:[%s4 + $0x4f0] sm:$0xf]
    %v1735 = vld [vmem:[%s4 + $0x4f8] sm:$0xf]
    %v1736 = vld [vmem:[%s4 + $0x500] sm:$0xf]
    %v1737 = vld [vmem:[%s4 + $0x508] sm:$0xf]
    %v1738 = vld [vmem:[%s4 + $0x510] sm:$0xf]
    %v1739 = vld [vmem:[%s4 + $0x518] sm:$0xf]
    %v1740 = vld [vmem:[%s4 + $0x520] sm:$0xf]
    %v1741 = vld [vmem:[%s4 + $0x528] sm:$0xf]
    %v1742 = vld [vmem:[%s4 + $0x530] sm:$0xf]
    %v1743 = vld [vmem:[%s4 + $0x538] sm:$0xf]
    %v1744 = vld [vmem:[%s4 + $0x540] sm:$0xf]
    %vm1745 = vcmask 818176
    %v1747 = vsel %vm1745, %v1572, 0
    %vm1749 = vcmask 1043456
    %v1751 = vsel %vm1749, %v1732, 0
    %v1754 = vsel %vm1749, %v1733, 0
    %v1757 = vsel %vm1749, %v1734, 0
    %v1760 = vsel %vm1749, %v1735, 0
    %v1763 = vsel %vm1749, %v1736, 0
    %v1766 = vsel %vm1749, %v1737, 0
    %v1769 = vsel %vm1749, %v1738, 0
    %v1772 = vsel %vm1749, %v1739, 0
    %v1775 = vsel %vm1749, %v1740, 0
    %v1778 = vsel %vm1749, %v1741, 0
    %v1781 = vsel %vm1749, %v1742, 0
    %v1784 = vsel %vm1749, %v1743, 0
    %v1787 = vsel %vm1749, %v1744, 0
    %1789 = vmatprep.subr.mxu0 0.0
    %1790 = vmatpush1.msra.mxu0 0.0
    %1791 = vmatprep.subr.mxu0 0.0
    %1792 = vmatpush1.msra.mxu0 0.0
    %1793 = vmatprep.subr.mxu0 0.0
    %1794 = vmatpush1.msra.mxu0 0.0
    %1795 = vmatprep.subr.mxu0 %v1754
    %1796 = vmatpush1.msra.mxu0 %v1751
    %1797 = vmatprep.subr.mxu0 %v1720
    %1798 = vmatpush1.msra.mxu0 %v1719
    %1799 = vmatprep.subr.mxu0 %v1707
    %1800 = vmatpush1.msra.mxu0 %v1706
    %1801 = vmatprep.subr.mxu0 %v1694
    %1802 = vmatpush1.msra.mxu0 %v1693
    %1803 = vmatprep.subr.mxu0 %v1681
    %1804 = vmatpush1.msra.mxu0 %v1680
    %1805 = vmatprep.subr.mxu0 %v1668
    %1806 = vmatpush1.msra.mxu0 %v1667
    %1807 = vmatprep.subr.mxu0 %v1655
    %1808 = vmatpush1.msra.mxu0 %v1654
    %1809 = vmatprep.subr.mxu0 %v1642
    %1810 = vmatpush1.msra.mxu0 %v1641
    %1811 = vmatprep.subr.mxu0 %v1629
    %1812 = vmatpush1.msra.mxu0 %v1628
    %1813 = vmatprep.subr.mxu0 %v1616
    %1814 = vmatpush1.msra.mxu0 %v1615
    %1815 = vmatprep.subr.mxu0 %v1603
    %1816 = vmatpush1.msra.mxu0 %v1602
    %1817 = vmatprep.subr.mxu0 %v1590
    %1818 = vmatpush1.msra.mxu0 %v1589
    %1819 = vmatprep.subr.mxu0 %v1577
    %1820 = vmatpush1.msra.mxu0 %v1576
    %1821 = vmatprep.subr.mxu0 0.0
    %1822 = vmatpush2.msra.mxu0 0.0
    %1823 = vmatprep.subr.mxu0 0.0
    %1824 = vmatpush2.msra.mxu0 0.0
    %1825 = vmatprep.subr.mxu0 0.0
    %1826 = vmatpush2.msra.mxu0 0.0
    %1827 = vmatprep.subr.mxu0 0.0
    %1828 = vmatpush2.msra.mxu0 0.0
    %1829 = vmatprep.subr.mxu0 0.0
    %1830 = vmatpush2.msra.mxu0 0.0
    %1831 = vmatprep.subr.mxu0 0.0
    %1832 = vmatpush2.msra.mxu0 0.0
    %1833 = vmatprep.subr.mxu0 0.0
    %1834 = vmatpush2.msra.mxu0 0.0
    %1835 = vmatprep.subr.mxu0 0.0
    %1836 = vmatpush2.msra.mxu0 0.0
    %1837 = vmatprep.subr.mxu0 0.0
    %1838 = vmatpush2.msra.mxu0 0.0
    %1839 = vmatprep.subr.mxu0 0.0
    %1840 = vmatpush2.msra.mxu0 0.0
    %1841 = vmatprep.subr.mxu0 0.0
    %1842 = vmatpush2.msra.mxu0 0.0
    %1843 = vmatprep.subr.mxu0 0.0
    %1844 = vmatpush2.msra.mxu0 0.0
    %1845 = vmatprep.subr.mxu0 0.0
    %1846 = vmatpush2.msra.mxu0 0.0
    %1847 = vmatprep.subr.mxu0 0.0
    %1848 = vmatpush2.msra.mxu0 0.0
    %1849 = vmatprep.subr.mxu0 0.0
    %1850 = vmatpush2.msra.mxu0 0.0
    %1851 = vmatprep.subr.mxu0 0.0
    %1852 = vmatpush2.msra.mxu0 0.0
    %1853 = vmatprep.mubr.f32.mxu0 0.0
    %1854 = vmatmul.mubr.f32.gmra.mxu0 %v1747
    %v1855 = vpop.f32.mrf.mxu0
    %v1856 = vadd.f32 0.0, %v1855
    %v1857 = vpop.f32.mrf.mxu0
    %v1858 = vadd.f32 0.0, %v1857
    %1859 = vdwg.mxu0
    %1860 = vmatprep.subr.mxu0 0.0
    %1861 = vmatpush1.msra.mxu0 0.0
    %1862 = vmatprep.subr.mxu0 0.0
    %1863 = vmatpush1.msra.mxu0 0.0
    %1864 = vmatprep.subr.mxu0 0.0
    %1865 = vmatpush1.msra.mxu0 0.0
    %1866 = vmatprep.subr.mxu0 %v1760
    %1867 = vmatpush1.msra.mxu0 %v1757
    %1868 = vmatprep.subr.mxu0 %v1722
    %1869 = vmatpush1.msra.mxu0 %v1721
    %1870 = vmatprep.subr.mxu0 %v1709
    %1871 = vmatpush1.msra.mxu0 %v1708
    %1872 = vmatprep.subr.mxu0 %v1696
    %1873 = vmatpush1.msra.mxu0 %v1695
    %1874 = vmatprep.subr.mxu0 %v1683
    %1875 = vmatpush1.msra.mxu0 %v1682
    %1876 = vmatprep.subr.mxu0 %v1670
    %1877 = vmatpush1.msra.mxu0 %v1669
    %1878 = vmatprep.subr.mxu0 %v1657
    %1879 = vmatpush1.msra.mxu0 %v1656
    %1880 = vmatprep.subr.mxu0 %v1644
    %1881 = vmatpush1.msra.mxu0 %v1643
    %1882 = vmatprep.subr.mxu0 %v1631
    %1883 = vmatpush1.msra.mxu0 %v1630
    %1884 = vmatprep.subr.mxu0 %v1618
    %1885 = vmatpush1.msra.mxu0 %v1617
    %1886 = vmatprep.subr.mxu0 %v1605
    %1887 = vmatpush1.msra.mxu0 %v1604
    %1888 = vmatprep.subr.mxu0 %v1592
    %1889 = vmatpush1.msra.mxu0 %v1591
    %1890 = vmatprep.subr.mxu0 %v1579
    %1891 = vmatpush1.msra.mxu0 %v1578
    %1892 = vmatprep.subr.mxu0 0.0
    %1893 = vmatpush2.msra.mxu0 0.0
    %1894 = vmatprep.subr.mxu0 0.0
    %1895 = vmatpush2.msra.mxu0 0.0
    %1896 = vmatprep.subr.mxu0 0.0
    %1897 = vmatpush2.msra.mxu0 0.0
    %1898 = vmatprep.subr.mxu0 0.0
    %1899 = vmatpush2.msra.mxu0 0.0
    %1900 = vmatprep.subr.mxu0 0.0
    %1901 = vmatpush2.msra.mxu0 0.0
    %1902 = vmatprep.subr.mxu0 0.0
    %1903 = vmatpush2.msra.mxu0 0.0
    %1904 = vmatprep.subr.mxu0 0.0
    %1905 = vmatpush2.msra.mxu0 0.0
    %1906 = vmatprep.subr.mxu0 0.0
    %1907 = vmatpush2.msra.mxu0 0.0
    %1908 = vmatprep.subr.mxu0 0.0
    %1909 = vmatpush2.msra.mxu0 0.0
    %1910 = vmatprep.subr.mxu0 0.0
    %1911 = vmatpush2.msra.mxu0 0.0
    %1912 = vmatprep.subr.mxu0 0.0
    %1913 = vmatpush2.msra.mxu0 0.0
    %1914 = vmatprep.subr.mxu0 0.0
    %1915 = vmatpush2.msra.mxu0 0.0
    %1916 = vmatprep.subr.mxu0 0.0
    %1917 = vmatpush2.msra.mxu0 0.0
    %1918 = vmatprep.subr.mxu0 0.0
    %1919 = vmatpush2.msra.mxu0 0.0
    %1920 = vmatprep.subr.mxu0 0.0
    %1921 = vmatpush2.msra.mxu0 0.0
    %1922 = vmatprep.subr.mxu0 0.0
    %1923 = vmatpush2.msra.mxu0 0.0
    %1924 = vmatprep.mubr.f32.mxu0 0.0
    %1925 = vmatmul.mubr.f32.gmra.mxu0 %v1747
    %v1926 = vpop.f32.mrf.mxu0
    %v1927 = vadd.f32 0.0, %v1926
    %v1928 = vpop.f32.mrf.mxu0
    %v1929 = vadd.f32 0.0, %v1928
    %1930 = vdwg.mxu0
    %1931 = vmatprep.subr.mxu0 0.0
    %1932 = vmatpush1.msra.mxu0 0.0
    %1933 = vmatprep.subr.mxu0 0.0
    %1934 = vmatpush1.msra.mxu0 0.0
    %1935 = vmatprep.subr.mxu0 0.0
    %1936 = vmatpush1.msra.mxu0 0.0
    %1937 = vmatprep.subr.mxu0 %v1766
    %1938 = vmatpush1.msra.mxu0 %v1763
    %1939 = vmatprep.subr.mxu0 %v1724
    %1940 = vmatpush1.msra.mxu0 %v1723
    %1941 = vmatprep.subr.mxu0 %v1711
    %1942 = vmatpush1.msra.mxu0 %v1710
    %1943 = vmatprep.subr.mxu0 %v1698
    %1944 = vmatpush1.msra.mxu0 %v1697
    %1945 = vmatprep.subr.mxu0 %v1685
    %1946 = vmatpush1.msra.mxu0 %v1684
    %1947 = vmatprep.subr.mxu0 %v1672
    %1948 = vmatpush1.msra.mxu0 %v1671
    %1949 = vmatprep.subr.mxu0 %v1659
    %1950 = vmatpush1.msra.mxu0 %v1658
    %1951 = vmatprep.subr.mxu0 %v1646
    %1952 = vmatpush1.msra.mxu0 %v1645
    %1953 = vmatprep.subr.mxu0 %v1633
    %1954 = vmatpush1.msra.mxu0 %v1632
    %1955 = vmatprep.subr.mxu0 %v1620
    %1956 = vmatpush1.msra.mxu0 %v1619
    %1957 = vmatprep.subr.mxu0 %v1607
    %1958 = vmatpush1.msra.mxu0 %v1606
    %1959 = vmatprep.subr.mxu0 %v1594
    %1960 = vmatpush1.msra.mxu0 %v1593
    %1961 = vmatprep.subr.mxu0 %v1581
    %1962 = vmatpush1.msra.mxu0 %v1580
    %1963 = vmatprep.subr.mxu0 0.0
    %1964 = vmatpush2.msra.mxu0 0.0
    %1965 = vmatprep.subr.mxu0 0.0
    %1966 = vmatpush2.msra.mxu0 0.0
    %1967 = vmatprep.subr.mxu0 0.0
    %1968 = vmatpush2.msra.mxu0 0.0
    %1969 = vmatprep.subr.mxu0 0.0
    %1970 = vmatpush2.msra.mxu0 0.0
    %1971 = vmatprep.subr.mxu0 0.0
    %1972 = vmatpush2.msra.mxu0 0.0
    %1973 = vmatprep.subr.mxu0 0.0
    %1974 = vmatpush2.msra.mxu0 0.0
    %1975 = vmatprep.subr.mxu0 0.0
    %1976 = vmatpush2.msra.mxu0 0.0
    %1977 = vmatprep.subr.mxu0 0.0
    %1978 = vmatpush2.msra.mxu0 0.0
    %1979 = vmatprep.subr.mxu0 0.0
    %1980 = vmatpush2.msra.mxu0 0.0
    %1981 = vmatprep.subr.mxu0 0.0
    %1982 = vmatpush2.msra.mxu0 0.0
    %1983 = vmatprep.subr.mxu0 0.0
    %1984 = vmatpush2.msra.mxu0 0.0
    %1985 = vmatprep.subr.mxu0 0.0
    %1986 = vmatpush2.msra.mxu0 0.0
    %1987 = vmatprep.subr.mxu0 0.0
    %1988 = vmatpush2.msra.mxu0 0.0
    %1989 = vmatprep.subr.mxu0 0.0
    %1990 = vmatpush2.msra.mxu0 0.0
    %1991 = vmatprep.subr.mxu0 0.0
    %1992 = vmatpush2.msra.mxu0 0.0
    %1993 = vmatprep.subr.mxu0 0.0
    %1994 = vmatpush2.msra.mxu0 0.0
    %1995 = vmatprep.mubr.f32.mxu0 0.0
    %1996 = vmatmul.mubr.f32.gmra.mxu0 %v1747
    %v1997 = vpop.f32.mrf.mxu0
    %v1998 = vadd.f32 0.0, %v1997
    %v1999 = vpop.f32.mrf.mxu0
    %v2000 = vadd.f32 0.0, %v1999
    %2001 = vdwg.mxu0
    %2002 = vmatprep.subr.mxu0 0.0
    %2003 = vmatpush1.msra.mxu0 0.0
    %2004 = vmatprep.subr.mxu0 0.0
    %2005 = vmatpush1.msra.mxu0 0.0
    %2006 = vmatprep.subr.mxu0 0.0
    %2007 = vmatpush1.msra.mxu0 0.0
    %2008 = vmatprep.subr.mxu0 %v1772
    %2009 = vmatpush1.msra.mxu0 %v1769
    %2010 = vmatprep.subr.mxu0 %v1726
    %2011 = vmatpush1.msra.mxu0 %v1725
    %2012 = vmatprep.subr.mxu0 %v1713
    %2013 = vmatpush1.msra.mxu0 %v1712
    %2014 = vmatprep.subr.mxu0 %v1700
    %2015 = vmatpush1.msra.mxu0 %v1699
    %2016 = vmatprep.subr.mxu0 %v1687
    %2017 = vmatpush1.msra.mxu0 %v1686
    %2018 = vmatprep.subr.mxu0 %v1674
    %2019 = vmatpush1.msra.mxu0 %v1673
    %2020 = vmatprep.subr.mxu0 %v1661
    %2021 = vmatpush1.msra.mxu0 %v1660
    %2022 = vmatprep.subr.mxu0 %v1648
    %2023 = vmatpush1.msra.mxu0 %v1647
    %2024 = vmatprep.subr.mxu0 %v1635
    %2025 = vmatpush1.msra.mxu0 %v1634
    %2026 = vmatprep.subr.mxu0 %v1622
    %2027 = vmatpush1.msra.mxu0 %v1621
    %2028 = vmatprep.subr.mxu0 %v1609
    %2029 = vmatpush1.msra.mxu0 %v1608
    %2030 = vmatprep.subr.mxu0 %v1596
    %2031 = vmatpush1.msra.mxu0 %v1595
    %2032 = vmatprep.subr.mxu0 %v1583
    %2033 = vmatpush1.msra.mxu0 %v1582
    %2034 = vmatprep.subr.mxu0 0.0
    %2035 = vmatpush2.msra.mxu0 0.0
    %2036 = vmatprep.subr.mxu0 0.0
    %2037 = vmatpush2.msra.mxu0 0.0
    %2038 = vmatprep.subr.mxu0 0.0
    %2039 = vmatpush2.msra.mxu0 0.0
    %2040 = vmatprep.subr.mxu0 0.0
    %2041 = vmatpush2.msra.mxu0 0.0
    %2042 = vmatprep.subr.mxu0 0.0
    %2043 = vmatpush2.msra.mxu0 0.0
    %2044 = vmatprep.subr.mxu0 0.0
    %2045 = vmatpush2.msra.mxu0 0.0
    %2046 = vmatprep.subr.mxu0 0.0
    %2047 = vmatpush2.msra.mxu0 0.0
    %2048 = vmatprep.subr.mxu0 0.0
    %2049 = vmatpush2.msra.mxu0 0.0
    %2050 = vmatprep.subr.mxu0 0.0
    %2051 = vmatpush2.msra.mxu0 0.0
    %2052 = vmatprep.subr.mxu0 0.0
    %2053 = vmatpush2.msra.mxu0 0.0
    %2054 = vmatprep.subr.mxu0 0.0
    %2055 = vmatpush2.msra.mxu0 0.0
    %2056 = vmatprep.subr.mxu0 0.0
    %2057 = vmatpush2.msra.mxu0 0.0
    %2058 = vmatprep.subr.mxu0 0.0
    %2059 = vmatpush2.msra.mxu0 0.0
    %2060 = vmatprep.subr.mxu0 0.0
    %2061 = vmatpush2.msra.mxu0 0.0
    %2062 = vmatprep.subr.mxu0 0.0
    %2063 = vmatpush2.msra.mxu0 0.0
    %2064 = vmatprep.subr.mxu0 0.0
    %2065 = vmatpush2.msra.mxu0 0.0
    %2066 = vmatprep.mubr.f32.mxu0 0.0
    %2067 = vmatmul.mubr.f32.gmra.mxu0 %v1747
    %v2068 = vpop.f32.mrf.mxu0
    %v2069 = vadd.f32 0.0, %v2068
    %v2070 = vpop.f32.mrf.mxu0
    %v2071 = vadd.f32 0.0, %v2070
    %2072 = vdwg.mxu0
    %2073 = vmatprep.subr.mxu0 0.0
    %2074 = vmatpush1.msra.mxu0 0.0
    %2075 = vmatprep.subr.mxu0 0.0
    %2076 = vmatpush1.msra.mxu0 0.0
    %2077 = vmatprep.subr.mxu0 0.0
    %2078 = vmatpush1.msra.mxu0 0.0
    %2079 = vmatprep.subr.mxu0 %v1778
    %2080 = vmatpush1.msra.mxu0 %v1775
    %2081 = vmatprep.subr.mxu0 %v1728
    %2082 = vmatpush1.msra.mxu0 %v1727
    %2083 = vmatprep.subr.mxu0 %v1715
    %2084 = vmatpush1.msra.mxu0 %v1714
    %2085 = vmatprep.subr.mxu0 %v1702
    %2086 = vmatpush1.msra.mxu0 %v1701
    %2087 = vmatprep.subr.mxu0 %v1689
    %2088 = vmatpush1.msra.mxu0 %v1688
    %2089 = vmatprep.subr.mxu0 %v1676
    %2090 = vmatpush1.msra.mxu0 %v1675
    %2091 = vmatprep.subr.mxu0 %v1663
    %2092 = vmatpush1.msra.mxu0 %v1662
    %2093 = vmatprep.subr.mxu0 %v1650
    %2094 = vmatpush1.msra.mxu0 %v1649
    %2095 = vmatprep.subr.mxu0 %v1637
    %2096 = vmatpush1.msra.mxu0 %v1636
    %2097 = vmatprep.subr.mxu0 %v1624
    %2098 = vmatpush1.msra.mxu0 %v1623
    %2099 = vmatprep.subr.mxu0 %v1611
    %2100 = vmatpush1.msra.mxu0 %v1610
    %2101 = vmatprep.subr.mxu0 %v1598
    %2102 = vmatpush1.msra.mxu0 %v1597
    %2103 = vmatprep.subr.mxu0 %v1585
    %2104 = vmatpush1.msra.mxu0 %v1584
    %2105 = vmatprep.subr.mxu0 0.0
    %2106 = vmatpush2.msra.mxu0 0.0
    %2107 = vmatprep.subr.mxu0 0.0
    %2108 = vmatpush2.msra.mxu0 0.0
    %2109 = vmatprep.subr.mxu0 0.0
    %2110 = vmatpush2.msra.mxu0 0.0
    %2111 = vmatprep.subr.mxu0 0.0
    %2112 = vmatpush2.msra.mxu0 0.0
    %2113 = vmatprep.subr.mxu0 0.0
    %2114 = vmatpush2.msra.mxu0 0.0
    %2115 = vmatprep.subr.mxu0 0.0
    %2116 = vmatpush2.msra.mxu0 0.0
    %2117 = vmatprep.subr.mxu0 0.0
    %2118 = vmatpush2.msra.mxu0 0.0
    %2119 = vmatprep.subr.mxu0 0.0
    %2120 = vmatpush2.msra.mxu0 0.0
    %2121 = vmatprep.subr.mxu0 0.0
    %2122 = vmatpush2.msra.mxu0 0.0
    %2123 = vmatprep.subr.mxu0 0.0
    %2124 = vmatpush2.msra.mxu0 0.0
    %2125 = vmatprep.subr.mxu0 0.0
    %2126 = vmatpush2.msra.mxu0 0.0
    %2127 = vmatprep.subr.mxu0 0.0
    %2128 = vmatpush2.msra.mxu0 0.0
    %2129 = vmatprep.subr.mxu0 0.0
    %2130 = vmatpush2.msra.mxu0 0.0
    %2131 = vmatprep.subr.mxu0 0.0
    %2132 = vmatpush2.msra.mxu0 0.0
    %2133 = vmatprep.subr.mxu0 0.0
    %2134 = vmatpush2.msra.mxu0 0.0
    %2135 = vmatprep.subr.mxu0 0.0
    %2136 = vmatpush2.msra.mxu0 0.0
    %2137 = vmatprep.mubr.f32.mxu0 0.0
    %2138 = vmatmul.mubr.f32.gmra.mxu0 %v1747
    %v2139 = vpop.f32.mrf.mxu0
    %v2140 = vadd.f32 0.0, %v2139
    %v2141 = vpop.f32.mrf.mxu0
    %v2142 = vadd.f32 0.0, %v2141
    %2143 = vdwg.mxu0
    %2144 = vmatprep.subr.mxu0 0.0
    %2145 = vmatpush1.msra.mxu0 0.0
    %2146 = vmatprep.subr.mxu0 0.0
    %2147 = vmatpush1.msra.mxu0 0.0
    %2148 = vmatprep.subr.mxu0 0.0
    %2149 = vmatpush1.msra.mxu0 0.0
    %2150 = vmatprep.subr.mxu0 %v1784
    %2151 = vmatpush1.msra.mxu0 %v1781
    %2152 = vmatprep.subr.mxu0 %v1730
    %2153 = vmatpush1.msra.mxu0 %v1729
    %2154 = vmatprep.subr.mxu0 %v1717
    %2155 = vmatpush1.msra.mxu0 %v1716
    %2156 = vmatprep.subr.mxu0 %v1704
    %2157 = vmatpush1.msra.mxu0 %v1703
    %2158 = vmatprep.subr.mxu0 %v1691
    %2159 = vmatpush1.msra.mxu0 %v1690
    %2160 = vmatprep.subr.mxu0 %v1678
    %2161 = vmatpush1.msra.mxu0 %v1677
    %2162 = vmatprep.subr.mxu0 %v1665
    %2163 = vmatpush1.msra.mxu0 %v1664
    %2164 = vmatprep.subr.mxu0 %v1652
    %2165 = vmatpush1.msra.mxu0 %v1651
    %2166 = vmatprep.subr.mxu0 %v1639
    %2167 = vmatpush1.msra.mxu0 %v1638
    %2168 = vmatprep.subr.mxu0 %v1626
    %2169 = vmatpush1.msra.mxu0 %v1625
    %2170 = vmatprep.subr.mxu0 %v1613
    %2171 = vmatpush1.msra.mxu0 %v1612
    %2172 = vmatprep.subr.mxu0 %v1600
    %2173 = vmatpush1.msra.mxu0 %v1599
    %2174 = vmatprep.subr.mxu0 %v1587
    %2175 = vmatpush1.msra.mxu0 %v1586
    %2176 = vmatprep.subr.mxu0 0.0
    %2177 = vmatpush2.msra.mxu0 0.0
    %2178 = vmatprep.subr.mxu0 0.0
    %2179 = vmatpush2.msra.mxu0 0.0
    %2180 = vmatprep.subr.mxu0 0.0
    %2181 = vmatpush2.msra.mxu0 0.0
    %2182 = vmatprep.subr.mxu0 0.0
    %2183 = vmatpush2.msra.mxu0 0.0
    %2184 = vmatprep.subr.mxu0 0.0
    %2185 = vmatpush2.msra.mxu0 0.0
    %2186 = vmatprep.subr.mxu0 0.0
    %2187 = vmatpush2.msra.mxu0 0.0
    %2188 = vmatprep.subr.mxu0 0.0
    %2189 = vmatpush2.msra.mxu0 0.0
    %2190 = vmatprep.subr.mxu0 0.0
    %2191 = vmatpush2.msra.mxu0 0.0
    %2192 = vmatprep.subr.mxu0 0.0
    %2193 = vmatpush2.msra.mxu0 0.0
    %2194 = vmatprep.subr.mxu0 0.0
    %2195 = vmatpush2.msra.mxu0 0.0
    %2196 = vmatprep.subr.mxu0 0.0
    %2197 = vmatpush2.msra.mxu0 0.0
    %2198 = vmatprep.subr.mxu0 0.0
    %2199 = vmatpush2.msra.mxu0 0.0
    %2200 = vmatprep.subr.mxu0 0.0
    %2201 = vmatpush2.msra.mxu0 0.0
    %2202 = vmatprep.subr.mxu0 0.0
    %2203 = vmatpush2.msra.mxu0 0.0
    %2204 = vmatprep.subr.mxu0 0.0
    %2205 = vmatpush2.msra.mxu0 0.0
    %2206 = vmatprep.subr.mxu0 0.0
    %2207 = vmatpush2.msra.mxu0 0.0
    %2208 = vmatprep.mubr.f32.mxu0 0.0
    %2209 = vmatmul.mubr.f32.gmra.mxu0 %v1747
    %v2210 = vpop.f32.mrf.mxu0
    %v2211 = vadd.f32 0.0, %v2210
    %v2212 = vpop.f32.mrf.mxu0
    %v2213 = vadd.f32 0.0, %v2212
    %2214 = vdwg.mxu0
    %2215 = vmatprep.subr.mxu0 0.0
    %2216 = vmatpush1.msra.mxu0 0.0
    %2217 = vmatprep.subr.mxu0 0.0
    %2218 = vmatpush1.msra.mxu0 0.0
    %2219 = vmatprep.subr.mxu0 0.0
    %2220 = vmatpush1.msra.mxu0 0.0
    %2221 = vmatprep.subr.mxu0 0.0
    %2222 = vmatpush1.msra.mxu0 %v1787
    %2223 = vmatprep.subr.mxu0 0.0
    %2224 = vmatpush1.msra.mxu0 %v1731
    %2225 = vmatprep.subr.mxu0 0.0
    %2226 = vmatpush1.msra.mxu0 %v1718
    %2227 = vmatprep.subr.mxu0 0.0
    %2228 = vmatpush1.msra.mxu0 %v1705
    %2229 = vmatprep.subr.mxu0 0.0
    %2230 = vmatpush1.msra.mxu0 %v1692
    %2231 = vmatprep.subr.mxu0 0.0
    %2232 = vmatpush1.msra.mxu0 %v1679
    %2233 = vmatprep.subr.mxu0 0.0
    %2234 = vmatpush1.msra.mxu0 %v1666
    %2235 = vmatprep.subr.mxu0 0.0
    %2236 = vmatpush1.msra.mxu0 %v1653
    %2237 = vmatprep.subr.mxu0 0.0
    %2238 = vmatpush1.msra.mxu0 %v1640
    %2239 = vmatprep.subr.mxu0 0.0
    %2240 = vmatpush1.msra.mxu0 %v1627
    %2241 = vmatprep.subr.mxu0 0.0
    %2242 = vmatpush1.msra.mxu0 %v1614
    %2243 = vmatprep.subr.mxu0 0.0
    %2244 = vmatpush1.msra.mxu0 %v1601
    %2245 = vmatprep.subr.mxu0 0.0
    %2246 = vmatpush1.msra.mxu0 %v1588
    %2247 = vmatprep.subr.mxu0 0.0
    %2248 = vmatpush2.msra.mxu0 0.0
    %2249 = vmatprep.subr.mxu0 0.0
    %2250 = vmatpush2.msra.mxu0 0.0
    %2251 = vmatprep.subr.mxu0 0.0
    %2252 = vmatpush2.msra.mxu0 0.0
    %2253 = vmatprep.subr.mxu0 0.0
    %2254 = vmatpush2.msra.mxu0 0.0
    %2255 = vmatprep.subr.mxu0 0.0
    %2256 = vmatpush2.msra.mxu0 0.0
    %2257 = vmatprep.subr.mxu0 0.0
    %2258 = vmatpush2.msra.mxu0 0.0
    %2259 = vmatprep.subr.mxu0 0.0
    %2260 = vmatpush2.msra.mxu0 0.0
    %2261 = vmatprep.subr.mxu0 0.0
    %2262 = vmatpush2.msra.mxu0 0.0
    %2263 = vmatprep.subr.mxu0 0.0
    %2264 = vmatpush2.msra.mxu0 0.0
    %2265 = vmatprep.subr.mxu0 0.0
    %2266 = vmatpush2.msra.mxu0 0.0
    %2267 = vmatprep.subr.mxu0 0.0
    %2268 = vmatpush2.msra.mxu0 0.0
    %2269 = vmatprep.subr.mxu0 0.0
    %2270 = vmatpush2.msra.mxu0 0.0
    %2271 = vmatprep.subr.mxu0 0.0
    %2272 = vmatpush2.msra.mxu0 0.0
    %2273 = vmatprep.subr.mxu0 0.0
    %2274 = vmatpush2.msra.mxu0 0.0
    %2275 = vmatprep.subr.mxu0 0.0
    %2276 = vmatpush2.msra.mxu0 0.0
    %2277 = vmatprep.subr.mxu0 0.0
    %2278 = vmatpush2.msra.mxu0 0.0
    %2279 = vmatprep.mubr.f32.mxu0 0.0
    %2280 = vmatmul.mubr.f32.gmra.mxu0 %v1747
    %v2281 = vpop.f32.mrf.mxu0
    %v2282 = vadd.f32 0.0, %v2281
    %v2283 = vpop.f32.mrf.mxu0
    %2284 = vdwg.mxu0
    %v2286 = vsel %vm1745, %v1575, 0
    %2288 = vmatprep.subr.mxu0 0.0
    %2289 = vmatpush1.msra.mxu0 0.0
    %2290 = vmatprep.subr.mxu0 0.0
    %2291 = vmatpush1.msra.mxu0 0.0
    %2292 = vmatprep.subr.mxu0 0.0
    %2293 = vmatpush1.msra.mxu0 0.0
    %2294 = vmatprep.subr.mxu0 %v1754
    %2295 = vmatpush1.msra.mxu0 %v1751
    %2296 = vmatprep.subr.mxu0 %v1720
    %2297 = vmatpush1.msra.mxu0 %v1719
    %2298 = vmatprep.subr.mxu0 %v1707
    %2299 = vmatpush1.msra.mxu0 %v1706
    %2300 = vmatprep.subr.mxu0 %v1694
    %2301 = vmatpush1.msra.mxu0 %v1693
    %2302 = vmatprep.subr.mxu0 %v1681
    %2303 = vmatpush1.msra.mxu0 %v1680
    %2304 = vmatprep.subr.mxu0 %v1668
    %2305 = vmatpush1.msra.mxu0 %v1667
    %2306 = vmatprep.subr.mxu0 %v1655
    %2307 = vmatpush1.msra.mxu0 %v1654
    %2308 = vmatprep.subr.mxu0 %v1642
    %2309 = vmatpush1.msra.mxu0 %v1641
    %2310 = vmatprep.subr.mxu0 %v1629
    %2311 = vmatpush1.msra.mxu0 %v1628
    %2312 = vmatprep.subr.mxu0 %v1616
    %2313 = vmatpush1.msra.mxu0 %v1615
    %2314 = vmatprep.subr.mxu0 %v1603
    %2315 = vmatpush1.msra.mxu0 %v1602
    %2316 = vmatprep.subr.mxu0 %v1590
    %2317 = vmatpush1.msra.mxu0 %v1589
    %2318 = vmatprep.subr.mxu0 %v1577
    %2319 = vmatpush1.msra.mxu0 %v1576
    %2320 = vmatprep.subr.mxu0 0.0
    %2321 = vmatpush2.msra.mxu0 0.0
    %2322 = vmatprep.subr.mxu0 0.0
    %2323 = vmatpush2.msra.mxu0 0.0
    %2324 = vmatprep.subr.mxu0 0.0
    %2325 = vmatpush2.msra.mxu0 0.0
    %2326 = vmatprep.subr.mxu0 0.0
    %2327 = vmatpush2.msra.mxu0 0.0
    %2328 = vmatprep.subr.mxu0 0.0
    %2329 = vmatpush2.msra.mxu0 0.0
    %2330 = vmatprep.subr.mxu0 0.0
    %2331 = vmatpush2.msra.mxu0 0.0
    %2332 = vmatprep.subr.mxu0 0.0
    %2333 = vmatpush2.msra.mxu0 0.0
    %2334 = vmatprep.subr.mxu0 0.0
    %2335 = vmatpush2.msra.mxu0 0.0
    %2336 = vmatprep.subr.mxu0 0.0
    %2337 = vmatpush2.msra.mxu0 0.0
    %2338 = vmatprep.subr.mxu0 0.0
    %2339 = vmatpush2.msra.mxu0 0.0
    %2340 = vmatprep.subr.mxu0 0.0
    %2341 = vmatpush2.msra.mxu0 0.0
    %2342 = vmatprep.subr.mxu0 0.0
    %2343 = vmatpush2.msra.mxu0 0.0
    %2344 = vmatprep.subr.mxu0 0.0
    %2345 = vmatpush2.msra.mxu0 0.0
    %2346 = vmatprep.subr.mxu0 0.0
    %2347 = vmatpush2.msra.mxu0 0.0
    %2348 = vmatprep.subr.mxu0 0.0
    %2349 = vmatpush2.msra.mxu0 0.0
    %2350 = vmatprep.subr.mxu0 0.0
    %2351 = vmatpush2.msra.mxu0 0.0
    %2352 = vmatprep.mubr.f32.mxu0 0.0
    %2353 = vmatmul.mubr.f32.gmra.mxu0 %v2286
    %v2354 = vpop.f32.mrf.mxu0
    %v2355 = vadd.f32 0.0, %v2354
    %v2356 = vpop.f32.mrf.mxu0
    %v2357 = vadd.f32 0.0, %v2356
    %2358 = vdwg.mxu0
    %2359 = vmatprep.subr.mxu0 0.0
    %2360 = vmatpush1.msra.mxu0 0.0
    %2361 = vmatprep.subr.mxu0 0.0
    %2362 = vmatpush1.msra.mxu0 0.0
    %2363 = vmatprep.subr.mxu0 0.0
    %2364 = vmatpush1.msra.mxu0 0.0
    %2365 = vmatprep.subr.mxu0 %v1760
    %2366 = vmatpush1.msra.mxu0 %v1757
    %2367 = vmatprep.subr.mxu0 %v1722
    %2368 = vmatpush1.msra.mxu0 %v1721
    %2369 = vmatprep.subr.mxu0 %v1709
    %2370 = vmatpush1.msra.mxu0 %v1708
    %2371 = vmatprep.subr.mxu0 %v1696
    %2372 = vmatpush1.msra.mxu0 %v1695
    %2373 = vmatprep.subr.mxu0 %v1683
    %2374 = vmatpush1.msra.mxu0 %v1682
    %2375 = vmatprep.subr.mxu0 %v1670
    %2376 = vmatpush1.msra.mxu0 %v1669
    %2377 = vmatprep.subr.mxu0 %v1657
    %2378 = vmatpush1.msra.mxu0 %v1656
    %2379 = vmatprep.subr.mxu0 %v1644
    %2380 = vmatpush1.msra.mxu0 %v1643
    %2381 = vmatprep.subr.mxu0 %v1631
    %2382 = vmatpush1.msra.mxu0 %v1630
    %2383 = vmatprep.subr.mxu0 %v1618
    %2384 = vmatpush1.msra.mxu0 %v1617
    %2385 = vmatprep.subr.mxu0 %v1605
    %2386 = vmatpush1.msra.mxu0 %v1604
    %2387 = vmatprep.subr.mxu0 %v1592
    %2388 = vmatpush1.msra.mxu0 %v1591
    %2389 = vmatprep.subr.mxu0 %v1579
    %2390 = vmatpush1.msra.mxu0 %v1578
    %2391 = vmatprep.subr.mxu0 0.0
    %2392 = vmatpush2.msra.mxu0 0.0
    %2393 = vmatprep.subr.mxu0 0.0
    %2394 = vmatpush2.msra.mxu0 0.0
    %2395 = vmatprep.subr.mxu0 0.0
    %2396 = vmatpush2.msra.mxu0 0.0
    %2397 = vmatprep.subr.mxu0 0.0
    %2398 = vmatpush2.msra.mxu0 0.0
    %2399 = vmatprep.subr.mxu0 0.0
    %2400 = vmatpush2.msra.mxu0 0.0
    %2401 = vmatprep.subr.mxu0 0.0
    %2402 = vmatpush2.msra.mxu0 0.0
    %2403 = vmatprep.subr.mxu0 0.0
    %2404 = vmatpush2.msra.mxu0 0.0
    %2405 = vmatprep.subr.mxu0 0.0
    %2406 = vmatpush2.msra.mxu0 0.0
    %2407 = vmatprep.subr.mxu0 0.0
    %2408 = vmatpush2.msra.mxu0 0.0
    %2409 = vmatprep.subr.mxu0 0.0
    %2410 = vmatpush2.msra.mxu0 0.0
    %2411 = vmatprep.subr.mxu0 0.0
    %2412 = vmatpush2.msra.mxu0 0.0
    %2413 = vmatprep.subr.mxu0 0.0
    %2414 = vmatpush2.msra.mxu0 0.0
    %2415 = vmatprep.subr.mxu0 0.0
    %2416 = vmatpush2.msra.mxu0 0.0
    %2417 = vmatprep.subr.mxu0 0.0
    %2418 = vmatpush2.msra.mxu0 0.0
    %2419 = vmatprep.subr.mxu0 0.0
    %2420 = vmatpush2.msra.mxu0 0.0
    %2421 = vmatprep.subr.mxu0 0.0
    %2422 = vmatpush2.msra.mxu0 0.0
    %2423 = vmatprep.mubr.f32.mxu0 0.0
    %2424 = vmatmul.mubr.f32.gmra.mxu0 %v2286
    %v2425 = vpop.f32.mrf.mxu0
    %v2426 = vadd.f32 0.0, %v2425
    %v2427 = vpop.f32.mrf.mxu0
    %v2428 = vadd.f32 0.0, %v2427
    %2429 = vdwg.mxu0
    %2430 = vmatprep.subr.mxu0 0.0
    %2431 = vmatpush1.msra.mxu0 0.0
    %2432 = vmatprep.subr.mxu0 0.0
    %2433 = vmatpush1.msra.mxu0 0.0
    %2434 = vmatprep.subr.mxu0 0.0
    %2435 = vmatpush1.msra.mxu0 0.0
    %2436 = vmatprep.subr.mxu0 %v1766
    %2437 = vmatpush1.msra.mxu0 %v1763
    %2438 = vmatprep.subr.mxu0 %v1724
    %2439 = vmatpush1.msra.mxu0 %v1723
    %2440 = vmatprep.subr.mxu0 %v1711
    %2441 = vmatpush1.msra.mxu0 %v1710
    %2442 = vmatprep.subr.mxu0 %v1698
    %2443 = vmatpush1.msra.mxu0 %v1697
    %2444 = vmatprep.subr.mxu0 %v1685
    %2445 = vmatpush1.msra.mxu0 %v1684
    %2446 = vmatprep.subr.mxu0 %v1672
    %2447 = vmatpush1.msra.mxu0 %v1671
    %2448 = vmatprep.subr.mxu0 %v1659
    %2449 = vmatpush1.msra.mxu0 %v1658
    %2450 = vmatprep.subr.mxu0 %v1646
    %2451 = vmatpush1.msra.mxu0 %v1645
    %2452 = vmatprep.subr.mxu0 %v1633
    %2453 = vmatpush1.msra.mxu0 %v1632
    %2454 = vmatprep.subr.mxu0 %v1620
    %2455 = vmatpush1.msra.mxu0 %v1619
    %2456 = vmatprep.subr.mxu0 %v1607
    %2457 = vmatpush1.msra.mxu0 %v1606
    %2458 = vmatprep.subr.mxu0 %v1594
    %2459 = vmatpush1.msra.mxu0 %v1593
    %2460 = vmatprep.subr.mxu0 %v1581
    %2461 = vmatpush1.msra.mxu0 %v1580
    %2462 = vmatprep.subr.mxu0 0.0
    %2463 = vmatpush2.msra.mxu0 0.0
    %2464 = vmatprep.subr.mxu0 0.0
    %2465 = vmatpush2.msra.mxu0 0.0
    %2466 = vmatprep.subr.mxu0 0.0
    %2467 = vmatpush2.msra.mxu0 0.0
    %2468 = vmatprep.subr.mxu0 0.0
    %2469 = vmatpush2.msra.mxu0 0.0
    %2470 = vmatprep.subr.mxu0 0.0
    %2471 = vmatpush2.msra.mxu0 0.0
    %2472 = vmatprep.subr.mxu0 0.0
    %2473 = vmatpush2.msra.mxu0 0.0
    %2474 = vmatprep.subr.mxu0 0.0
    %2475 = vmatpush2.msra.mxu0 0.0
    %2476 = vmatprep.subr.mxu0 0.0
    %2477 = vmatpush2.msra.mxu0 0.0
    %2478 = vmatprep.subr.mxu0 0.0
    %2479 = vmatpush2.msra.mxu0 0.0
    %2480 = vmatprep.subr.mxu0 0.0
    %2481 = vmatpush2.msra.mxu0 0.0
    %2482 = vmatprep.subr.mxu0 0.0
    %2483 = vmatpush2.msra.mxu0 0.0
    %2484 = vmatprep.subr.mxu0 0.0
    %2485 = vmatpush2.msra.mxu0 0.0
    %2486 = vmatprep.subr.mxu0 0.0
    %2487 = vmatpush2.msra.mxu0 0.0
    %2488 = vmatprep.subr.mxu0 0.0
    %2489 = vmatpush2.msra.mxu0 0.0
    %2490 = vmatprep.subr.mxu0 0.0
    %2491 = vmatpush2.msra.mxu0 0.0
    %2492 = vmatprep.subr.mxu0 0.0
    %2493 = vmatpush2.msra.mxu0 0.0
    %2494 = vmatprep.mubr.f32.mxu0 0.0
    %2495 = vmatmul.mubr.f32.gmra.mxu0 %v2286
    %v2496 = vpop.f32.mrf.mxu0
    %v2497 = vadd.f32 0.0, %v2496
    %v2498 = vpop.f32.mrf.mxu0
    %v2499 = vadd.f32 0.0, %v2498
    %2500 = vdwg.mxu0
    %2501 = vmatprep.subr.mxu0 0.0
    %2502 = vmatpush1.msra.mxu0 0.0
    %2503 = vmatprep.subr.mxu0 0.0
    %2504 = vmatpush1.msra.mxu0 0.0
    %2505 = vmatprep.subr.mxu0 0.0
    %2506 = vmatpush1.msra.mxu0 0.0
    %2507 = vmatprep.subr.mxu0 %v1772
    %2508 = vmatpush1.msra.mxu0 %v1769
    %2509 = vmatprep.subr.mxu0 %v1726
    %2510 = vmatpush1.msra.mxu0 %v1725
    %2511 = vmatprep.subr.mxu0 %v1713
    %2512 = vmatpush1.msra.mxu0 %v1712
    %2513 = vmatprep.subr.mxu0 %v1700
    %2514 = vmatpush1.msra.mxu0 %v1699
    %2515 = vmatprep.subr.mxu0 %v1687
    %2516 = vmatpush1.msra.mxu0 %v1686
    %2517 = vmatprep.subr.mxu0 %v1674
    %2518 = vmatpush1.msra.mxu0 %v1673
    %2519 = vmatprep.subr.mxu0 %v1661
    %2520 = vmatpush1.msra.mxu0 %v1660
    %2521 = vmatprep.subr.mxu0 %v1648
    %2522 = vmatpush1.msra.mxu0 %v1647
    %2523 = vmatprep.subr.mxu0 %v1635
    %2524 = vmatpush1.msra.mxu0 %v1634
    %2525 = vmatprep.subr.mxu0 %v1622
    %2526 = vmatpush1.msra.mxu0 %v1621
    %2527 = vmatprep.subr.mxu0 %v1609
    %2528 = vmatpush1.msra.mxu0 %v1608
    %2529 = vmatprep.subr.mxu0 %v1596
    %2530 = vmatpush1.msra.mxu0 %v1595
    %2531 = vmatprep.subr.mxu0 %v1583
    %2532 = vmatpush1.msra.mxu0 %v1582
    %2533 = vmatprep.subr.mxu0 0.0
    %2534 = vmatpush2.msra.mxu0 0.0
    %2535 = vmatprep.subr.mxu0 0.0
    %2536 = vmatpush2.msra.mxu0 0.0
    %2537 = vmatprep.subr.mxu0 0.0
    %2538 = vmatpush2.msra.mxu0 0.0
    %2539 = vmatprep.subr.mxu0 0.0
    %2540 = vmatpush2.msra.mxu0 0.0
    %2541 = vmatprep.subr.mxu0 0.0
    %2542 = vmatpush2.msra.mxu0 0.0
    %2543 = vmatprep.subr.mxu0 0.0
    %2544 = vmatpush2.msra.mxu0 0.0
    %2545 = vmatprep.subr.mxu0 0.0
    %2546 = vmatpush2.msra.mxu0 0.0
    %2547 = vmatprep.subr.mxu0 0.0
    %2548 = vmatpush2.msra.mxu0 0.0
    %2549 = vmatprep.subr.mxu0 0.0
    %2550 = vmatpush2.msra.mxu0 0.0
    %2551 = vmatprep.subr.mxu0 0.0
    %2552 = vmatpush2.msra.mxu0 0.0
    %2553 = vmatprep.subr.mxu0 0.0
    %2554 = vmatpush2.msra.mxu0 0.0
    %2555 = vmatprep.subr.mxu0 0.0
    %2556 = vmatpush2.msra.mxu0 0.0
    %2557 = vmatprep.subr.mxu0 0.0
    %2558 = vmatpush2.msra.mxu0 0.0
    %2559 = vmatprep.subr.mxu0 0.0
    %2560 = vmatpush2.msra.mxu0 0.0
    %2561 = vmatprep.subr.mxu0 0.0
    %2562 = vmatpush2.msra.mxu0 0.0
    %2563 = vmatprep.subr.mxu0 0.0
    %2564 = vmatpush2.msra.mxu0 0.0
    %2565 = vmatprep.mubr.f32.mxu0 0.0
    %2566 = vmatmul.mubr.f32.gmra.mxu0 %v2286
    %v2567 = vpop.f32.mrf.mxu0
    %v2568 = vadd.f32 0.0, %v2567
    %v2569 = vpop.f32.mrf.mxu0
    %v2570 = vadd.f32 0.0, %v2569
    %2571 = vdwg.mxu0
    %2572 = vmatprep.subr.mxu0 0.0
    %2573 = vmatpush1.msra.mxu0 0.0
    %2574 = vmatprep.subr.mxu0 0.0
    %2575 = vmatpush1.msra.mxu0 0.0
    %2576 = vmatprep.subr.mxu0 0.0
    %2577 = vmatpush1.msra.mxu0 0.0
    %2578 = vmatprep.subr.mxu0 %v1778
    %2579 = vmatpush1.msra.mxu0 %v1775
    %2580 = vmatprep.subr.mxu0 %v1728
    %2581 = vmatpush1.msra.mxu0 %v1727
    %2582 = vmatprep.subr.mxu0 %v1715
    %2583 = vmatpush1.msra.mxu0 %v1714
    %2584 = vmatprep.subr.mxu0 %v1702
    %2585 = vmatpush1.msra.mxu0 %v1701
    %2586 = vmatprep.subr.mxu0 %v1689
    %2587 = vmatpush1.msra.mxu0 %v1688
    %2588 = vmatprep.subr.mxu0 %v1676
    %2589 = vmatpush1.msra.mxu0 %v1675
    %2590 = vmatprep.subr.mxu0 %v1663
    %2591 = vmatpush1.msra.mxu0 %v1662
    %2592 = vmatprep.subr.mxu0 %v1650
    %2593 = vmatpush1.msra.mxu0 %v1649
    %2594 = vmatprep.subr.mxu0 %v1637
    %2595 = vmatpush1.msra.mxu0 %v1636
    %2596 = vmatprep.subr.mxu0 %v1624
    %2597 = vmatpush1.msra.mxu0 %v1623
    %2598 = vmatprep.subr.mxu0 %v1611
    %2599 = vmatpush1.msra.mxu0 %v1610
    %2600 = vmatprep.subr.mxu0 %v1598
    %2601 = vmatpush1.msra.mxu0 %v1597
    %2602 = vmatprep.subr.mxu0 %v1585
    %2603 = vmatpush1.msra.mxu0 %v1584
    %2604 = vmatprep.subr.mxu0 0.0
    %2605 = vmatpush2.msra.mxu0 0.0
    %2606 = vmatprep.subr.mxu0 0.0
    %2607 = vmatpush2.msra.mxu0 0.0
    %2608 = vmatprep.subr.mxu0 0.0
    %2609 = vmatpush2.msra.mxu0 0.0
    %2610 = vmatprep.subr.mxu0 0.0
    %2611 = vmatpush2.msra.mxu0 0.0
    %2612 = vmatprep.subr.mxu0 0.0
    %2613 = vmatpush2.msra.mxu0 0.0
    %2614 = vmatprep.subr.mxu0 0.0
    %2615 = vmatpush2.msra.mxu0 0.0
    %2616 = vmatprep.subr.mxu0 0.0
    %2617 = vmatpush2.msra.mxu0 0.0
    %2618 = vmatprep.subr.mxu0 0.0
    %2619 = vmatpush2.msra.mxu0 0.0
    %2620 = vmatprep.subr.mxu0 0.0
    %2621 = vmatpush2.msra.mxu0 0.0
    %2622 = vmatprep.subr.mxu0 0.0
    %2623 = vmatpush2.msra.mxu0 0.0
    %2624 = vmatprep.subr.mxu0 0.0
    %2625 = vmatpush2.msra.mxu0 0.0
    %2626 = vmatprep.subr.mxu0 0.0
    %2627 = vmatpush2.msra.mxu0 0.0
    %2628 = vmatprep.subr.mxu0 0.0
    %2629 = vmatpush2.msra.mxu0 0.0
    %2630 = vmatprep.subr.mxu0 0.0
    %2631 = vmatpush2.msra.mxu0 0.0
    %2632 = vmatprep.subr.mxu0 0.0
    %2633 = vmatpush2.msra.mxu0 0.0
    %2634 = vmatprep.subr.mxu0 0.0
    %2635 = vmatpush2.msra.mxu0 0.0
    %2636 = vmatprep.mubr.f32.mxu0 0.0
    %2637 = vmatmul.mubr.f32.gmra.mxu0 %v2286
    %v2638 = vpop.f32.mrf.mxu0
    %v2639 = vadd.f32 0.0, %v2638
    %v2640 = vpop.f32.mrf.mxu0
    %v2641 = vadd.f32 0.0, %v2640
    %2642 = vdwg.mxu0
    %2643 = vmatprep.subr.mxu0 0.0
    %2644 = vmatpush1.msra.mxu0 0.0
    %2645 = vmatprep.subr.mxu0 0.0
    %2646 = vmatpush1.msra.mxu0 0.0
    %2647 = vmatprep.subr.mxu0 0.0
    %2648 = vmatpush1.msra.mxu0 0.0
    %2649 = vmatprep.subr.mxu0 %v1784
    %2650 = vmatpush1.msra.mxu0 %v1781
    %2651 = vmatprep.subr.mxu0 %v1730
    %2652 = vmatpush1.msra.mxu0 %v1729
    %2653 = vmatprep.subr.mxu0 %v1717
    %2654 = vmatpush1.msra.mxu0 %v1716
    %2655 = vmatprep.subr.mxu0 %v1704
    %2656 = vmatpush1.msra.mxu0 %v1703
    %2657 = vmatprep.subr.mxu0 %v1691
    %2658 = vmatpush1.msra.mxu0 %v1690
    %2659 = vmatprep.subr.mxu0 %v1678
    %2660 = vmatpush1.msra.mxu0 %v1677
    %2661 = vmatprep.subr.mxu0 %v1665
    %2662 = vmatpush1.msra.mxu0 %v1664
    %2663 = vmatprep.subr.mxu0 %v1652
    %2664 = vmatpush1.msra.mxu0 %v1651
    %2665 = vmatprep.subr.mxu0 %v1639
    %2666 = vmatpush1.msra.mxu0 %v1638
    %2667 = vmatprep.subr.mxu0 %v1626
    %2668 = vmatpush1.msra.mxu0 %v1625
    %2669 = vmatprep.subr.mxu0 %v1613
    %2670 = vmatpush1.msra.mxu0 %v1612
    %2671 = vmatprep.subr.mxu0 %v1600
    %2672 = vmatpush1.msra.mxu0 %v1599
    %2673 = vmatprep.subr.mxu0 %v1587
    %2674 = vmatpush1.msra.mxu0 %v1586
    %2675 = vmatprep.subr.mxu0 0.0
    %2676 = vmatpush2.msra.mxu0 0.0
    %2677 = vmatprep.subr.mxu0 0.0
    %2678 = vmatpush2.msra.mxu0 0.0
    %2679 = vmatprep.subr.mxu0 0.0
    %2680 = vmatpush2.msra.mxu0 0.0
    %2681 = vmatprep.subr.mxu0 0.0
    %2682 = vmatpush2.msra.mxu0 0.0
    %2683 = vmatprep.subr.mxu0 0.0
    %2684 = vmatpush2.msra.mxu0 0.0
    %2685 = vmatprep.subr.mxu0 0.0
    %2686 = vmatpush2.msra.mxu0 0.0
    %2687 = vmatprep.subr.mxu0 0.0
    %2688 = vmatpush2.msra.mxu0 0.0
    %2689 = vmatprep.subr.mxu0 0.0
    %2690 = vmatpush2.msra.mxu0 0.0
    %2691 = vmatprep.subr.mxu0 0.0
    %2692 = vmatpush2.msra.mxu0 0.0
    %2693 = vmatprep.subr.mxu0 0.0
    %2694 = vmatpush2.msra.mxu0 0.0
    %2695 = vmatprep.subr.mxu0 0.0
    %2696 = vmatpush2.msra.mxu0 0.0
    %2697 = vmatprep.subr.mxu0 0.0
    %2698 = vmatpush2.msra.mxu0 0.0
    %2699 = vmatprep.subr.mxu0 0.0
    %2700 = vmatpush2.msra.mxu0 0.0
    %2701 = vmatprep.subr.mxu0 0.0
    %2702 = vmatpush2.msra.mxu0 0.0
    %2703 = vmatprep.subr.mxu0 0.0
    %2704 = vmatpush2.msra.mxu0 0.0
    %2705 = vmatprep.subr.mxu0 0.0
    %2706 = vmatpush2.msra.mxu0 0.0
    %2707 = vmatprep.mubr.f32.mxu0 0.0
    %2708 = vmatmul.mubr.f32.gmra.mxu0 %v2286
    %v2709 = vpop.f32.mrf.mxu0
    %v2710 = vadd.f32 0.0, %v2709
    %v2711 = vpop.f32.mrf.mxu0
    %v2712 = vadd.f32 0.0, %v2711
    %2713 = vdwg.mxu0
    %2714 = vmatprep.subr.mxu0 0.0
    %2715 = vmatpush1.msra.mxu0 0.0
    %2716 = vmatprep.subr.mxu0 0.0
    %2717 = vmatpush1.msra.mxu0 0.0
    %2718 = vmatprep.subr.mxu0 0.0
    %2719 = vmatpush1.msra.mxu0 0.0
    %2720 = vmatprep.subr.mxu0 0.0
    %2721 = vmatpush1.msra.mxu0 %v1787
    %2722 = vmatprep.subr.mxu0 0.0
    %2723 = vmatpush1.msra.mxu0 %v1731
    %2724 = vmatprep.subr.mxu0 0.0
    %2725 = vmatpush1.msra.mxu0 %v1718
    %2726 = vmatprep.subr.mxu0 0.0
    %2727 = vmatpush1.msra.mxu0 %v1705
    %2728 = vmatprep.subr.mxu0 0.0
    %2729 = vmatpush1.msra.mxu0 %v1692
    %2730 = vmatprep.subr.mxu0 0.0
    %2731 = vmatpush1.msra.mxu0 %v1679
    %2732 = vmatprep.subr.mxu0 0.0
    %2733 = vmatpush1.msra.mxu0 %v1666
    %2734 = vmatprep.subr.mxu0 0.0
    %2735 = vmatpush1.msra.mxu0 %v1653
    %2736 = vmatprep.subr.mxu0 0.0
    %2737 = vmatpush1.msra.mxu0 %v1640
    %2738 = vmatprep.subr.mxu0 0.0
    %2739 = vmatpush1.msra.mxu0 %v1627
    %2740 = vmatprep.subr.mxu0 0.0
    %2741 = vmatpush1.msra.mxu0 %v1614
    %2742 = vmatprep.subr.mxu0 0.0
    %2743 = vmatpush1.msra.mxu0 %v1601
    %2744 = vmatprep.subr.mxu0 0.0
    %2745 = vmatpush1.msra.mxu0 %v1588
    %2746 = vmatprep.subr.mxu0 0.0
    %2747 = vmatpush2.msra.mxu0 0.0
    %2748 = vmatprep.subr.mxu0 0.0
    %2749 = vmatpush2.msra.mxu0 0.0
    %2750 = vmatprep.subr.mxu0 0.0
    %2751 = vmatpush2.msra.mxu0 0.0
    %2752 = vmatprep.subr.mxu0 0.0
    %2753 = vmatpush2.msra.mxu0 0.0
    %2754 = vmatprep.subr.mxu0 0.0
    %2755 = vmatpush2.msra.mxu0 0.0
    %2756 = vmatprep.subr.mxu0 0.0
    %2757 = vmatpush2.msra.mxu0 0.0
    %2758 = vmatprep.subr.mxu0 0.0
    %2759 = vmatpush2.msra.mxu0 0.0
    %2760 = vmatprep.subr.mxu0 0.0
    %2761 = vmatpush2.msra.mxu0 0.0
    %2762 = vmatprep.subr.mxu0 0.0
    %2763 = vmatpush2.msra.mxu0 0.0
    %2764 = vmatprep.subr.mxu0 0.0
    %2765 = vmatpush2.msra.mxu0 0.0
    %2766 = vmatprep.subr.mxu0 0.0
    %2767 = vmatpush2.msra.mxu0 0.0
    %2768 = vmatprep.subr.mxu0 0.0
    %2769 = vmatpush2.msra.mxu0 0.0
    %2770 = vmatprep.subr.mxu0 0.0
    %2771 = vmatpush2.msra.mxu0 0.0
    %2772 = vmatprep.subr.mxu0 0.0
    %2773 = vmatpush2.msra.mxu0 0.0
    %2774 = vmatprep.subr.mxu0 0.0
    %2775 = vmatpush2.msra.mxu0 0.0
    %2776 = vmatprep.subr.mxu0 0.0
    %2777 = vmatpush2.msra.mxu0 0.0
    %2778 = vmatprep.mubr.f32.mxu0 0.0
    %2779 = vmatmul.mubr.f32.gmra.mxu0 %v2286
    %v2780 = vpop.f32.mrf.mxu0
    %v2781 = vadd.f32 0.0, %v2780
    %v2782 = vpop.f32.mrf.mxu0
    %2783 = vdwg.mxu0
    %v2797 = vcombine.low %v1856, %v1858
    %v2798 = vcombine.low %v1927, %v1929
    %v2799 = vcombine.low %v1998, %v2000
    %v2800 = vcombine.low %v2069, %v2071
    %v2802 = vunpack.c.l.s4 1966171168
    %v2803 = vunpack.c.0.s8 %v2802
    %v2804 = vlaneseq
    %v2805 = vshrl.u32 %v2804, 7
    %v2806 = vsub.s32 %v2803, %v2805
    %v2807 = vrot.slane %v2797, %v2806
    %v2809 = vunpack.c.l.s4 1966171168
    %v2810 = vunpack.c.0.s8 %v2809
    %v2811 = vlaneseq
    %v2812 = vshrl.u32 %v2811, 7
    %v2813 = vsub.s32 %v2810, %v2812
    %v2814 = vrot.slane %v2798, %v2813
    %v2816 = vunpack.c.l.s4 1966171168
    %v2817 = vunpack.c.0.s8 %v2816
    %v2818 = vlaneseq
    %v2819 = vshrl.u32 %v2818, 7
    %v2820 = vsub.s32 %v2817, %v2819
    %v2821 = vrot.slane %v2799, %v2820
    %v2823 = vunpack.c.l.s4 1966171168
    %v2824 = vunpack.c.0.s8 %v2823
    %v2825 = vlaneseq
    %v2826 = vshrl.u32 %v2825, 7
    %v2827 = vsub.s32 %v2824, %v2826
    %v2828 = vrot.slane %v2800, %v2827
    %v2829 = vcombine.low %v2807, %v2814
    %v2830 = vcombine.low %v2821, %v2828
    %v2832 = vunpack.c.l.s4 1966171168
    %v2833 = vunpack.c.0.s8 %v2832
    %v2834 = vlaneseq
    %v2835 = vshrl.u32 %v2834, 7
    %v2836 = vsub.s32 %v2833, %v2835
    %v2837 = vrot.slane %v2829, %v2836
    %v2839 = vunpack.c.l.s4 1966171168
    %v2840 = vunpack.c.0.s8 %v2839
    %v2841 = vlaneseq
    %v2842 = vshrl.u32 %v2841, 7
    %v2843 = vsub.s32 %v2840, %v2842
    %v2844 = vrot.slane %v2830, %v2843
    %v2845 = vcombine.low %v2837, %v2844
    %v2846 = vcombine.low %v2140, %v2142
    %v2847 = vcombine.low %v2211, %v2213
    %v2849 = vunpack.c.l.s4 1966171168
    %v2850 = vunpack.c.0.s8 %v2849
    %v2851 = vlaneseq
    %v2852 = vshrl.u32 %v2851, 7
    %v2853 = vsub.s32 %v2850, %v2852
    %v2854 = vrot.slane %v2846, %v2853
    %v2856 = vunpack.c.l.s4 1966171168
    %v2857 = vunpack.c.0.s8 %v2856
    %v2858 = vlaneseq
    %v2859 = vshrl.u32 %v2858, 7
    %v2860 = vsub.s32 %v2857, %v2859
    %v2861 = vrot.slane %v2847, %v2860
    %v2863 = vunpack.c.l.s4 1966171168
    %v2864 = vunpack.c.0.s8 %v2863
    %v2865 = vlaneseq
    %v2866 = vshrl.u32 %v2865, 7
    %v2867 = vsub.s32 %v2864, %v2866
    %v2868 = vrot.slane %v2282, %v2867
    %v2869 = vcombine.low %v2854, %v2861
    %v2871 = vunpack.c.l.s4 1966171168
    %v2872 = vunpack.c.0.s8 %v2871
    %v2873 = vlaneseq
    %v2874 = vshrl.u32 %v2873, 7
    %v2875 = vsub.s32 %v2872, %v2874
    %v2876 = vrot.slane %v2869, %v2875
    %v2878 = vunpack.c.l.s4 1966171168
    %v2879 = vunpack.c.0.s8 %v2878
    %v2880 = vlaneseq
    %v2881 = vshrl.u32 %v2880, 7
    %v2882 = vsub.s32 %v2879, %v2881
    %v2883 = vrot.slane %v2868, %v2882
    %v2884 = vcombine.low %v2876, %v2883
    %v2887 = vmul.f32 %v21, %v2845
    %v2888 = vmul.f32 %v22, %v2884
    %v2889 = vmul.f32 %v23, %v2845
    %v2890 = vmul.f32 %v24, %v2884
    %v2904 = vcombine.low %v2355, %v2357
    %v2905 = vcombine.low %v2426, %v2428
    %v2906 = vcombine.low %v2497, %v2499
    %v2907 = vcombine.low %v2568, %v2570
    %v2909 = vunpack.c.l.s4 1966171168
    %v2910 = vunpack.c.0.s8 %v2909
    %v2911 = vlaneseq
    %v2912 = vshrl.u32 %v2911, 7
    %v2913 = vsub.s32 %v2910, %v2912
    %v2914 = vrot.slane %v2904, %v2913
    %v2916 = vunpack.c.l.s4 1966171168
    %v2917 = vunpack.c.0.s8 %v2916
    %v2918 = vlaneseq
    %v2919 = vshrl.u32 %v2918, 7
    %v2920 = vsub.s32 %v2917, %v2919
    %v2921 = vrot.slane %v2905, %v2920
    %v2923 = vunpack.c.l.s4 1966171168
    %v2924 = vunpack.c.0.s8 %v2923
    %v2925 = vlaneseq
    %v2926 = vshrl.u32 %v2925, 7
    %v2927 = vsub.s32 %v2924, %v2926
    %v2928 = vrot.slane %v2906, %v2927
    %v2930 = vunpack.c.l.s4 1966171168
    %v2931 = vunpack.c.0.s8 %v2930
    %v2932 = vlaneseq
    %v2933 = vshrl.u32 %v2932, 7
    %v2934 = vsub.s32 %v2931, %v2933
    %v2935 = vrot.slane %v2907, %v2934
    %v2936 = vcombine.low %v2914, %v2921
    %v2937 = vcombine.low %v2928, %v2935
    %v2939 = vunpack.c.l.s4 1966171168
    %v2940 = vunpack.c.0.s8 %v2939
    %v2941 = vlaneseq
    %v2942 = vshrl.u32 %v2941, 7
    %v2943 = vsub.s32 %v2940, %v2942
    %v2944 = vrot.slane %v2936, %v2943
    %v2946 = vunpack.c.l.s4 1966171168
    %v2947 = vunpack.c.0.s8 %v2946
    %v2948 = vlaneseq
    %v2949 = vshrl.u32 %v2948, 7
    %v2950 = vsub.s32 %v2947, %v2949
    %v2951 = vrot.slane %v2937, %v2950
    %v2952 = vcombine.low %v2944, %v2951
    %v2953 = vcombine.low %v2639, %v2641
    %v2954 = vcombine.low %v2710, %v2712
    %v2956 = vunpack.c.l.s4 1966171168
    %v2957 = vunpack.c.0.s8 %v2956
    %v2958 = vlaneseq
    %v2959 = vshrl.u32 %v2958, 7
    %v2960 = vsub.s32 %v2957, %v2959
    %v2961 = vrot.slane %v2953, %v2960
    %v2963 = vunpack.c.l.s4 1966171168
    %v2964 = vunpack.c.0.s8 %v2963
    %v2965 = vlaneseq
    %v2966 = vshrl.u32 %v2965, 7
    %v2967 = vsub.s32 %v2964, %v2966
    %v2968 = vrot.slane %v2954, %v2967
    %v2970 = vunpack.c.l.s4 1966171168
    %v2971 = vunpack.c.0.s8 %v2970
    %v2972 = vlaneseq
    %v2973 = vshrl.u32 %v2972, 7
    %v2974 = vsub.s32 %v2971, %v2973
    %v2975 = vrot.slane %v2781, %v2974
    %v2976 = vcombine.low %v2961, %v2968
    %v2978 = vunpack.c.l.s4 1966171168
    %v2979 = vunpack.c.0.s8 %v2978
    %v2980 = vlaneseq
    %v2981 = vshrl.u32 %v2980, 7
    %v2982 = vsub.s32 %v2979, %v2981
    %v2983 = vrot.slane %v2976, %v2982
    %v2985 = vunpack.c.l.s4 1966171168
    %v2986 = vunpack.c.0.s8 %v2985
    %v2987 = vlaneseq
    %v2988 = vshrl.u32 %v2987, 7
    %v2989 = vsub.s32 %v2986, %v2988
    %v2990 = vrot.slane %v2975, %v2989
    %v2991 = vcombine.low %v2983, %v2990
    %v2994 = vadd.f32 %v2887, %v2952
    %v2995 = vadd.f32 %v2888, %v2991
    %v2996 = vadd.f32 %v2889, %v2952
    %v2997 = vadd.f32 %v2890, %v2991
    %2998 = vst [vmem:[#allocation2] sm:$0xff] %v2994
    %v2999 = vlaneseq
    %vm3000 = vcmp.ge.s32.totalorder %v2999, 0
    %vm3001 = vcmp.lt.s32.totalorder %v2999, 576
    %vm3002 = vmand %vm3000, %vm3001
    %3003 = vst.msk [vmem:[#allocation2 + $0x8] sm:$0x1f] %vm3002, %v2995
    %3004 = vst [vmem:[#allocation2 + $0xd] sm:$0xff] %v2996
    %3005 = vst.msk [vmem:[#allocation2 + $0x15] sm:$0x1f] %vm3002, %v2997
    // Predicated region
    $region22: #{tpu_custom_call.1} parent=1 // pred_check
      _
    $region23: #{tpu_custom_call.1} parent=1 // pred_check_branch
      %3007 = sbr.rel (0) target = $region25
    $region24: #{tpu_custom_call.1} parent=1 // pred_region
      %s3009 = ssub.s32 416, 416
      %3010 = vsyncadd [#allocation3], %s3009
      %s3011 = sshll.u32 [#allocation2], 4
      %s3012 = int_to_ptr.vmem [resolvable:$true] %s3011
      %3017 = dma.vmem_to_hbm [thread:$0]  %s3012, 416, %s5, [#allocation3], 208, 208, 13
    $region25: #{tpu_custom_call.1} parent=1 // pred_fallthru
      _
    // Predicated region
    $region26: #{tpu_custom_call.1} parent=1 // pred_check
      _
    $region27: #{tpu_custom_call.1} parent=1 // pred_check_branch
      %3019 = sbr.rel (0) target = $region29
    $region28: #{tpu_custom_call.1} parent=1 // pred_region
      %3020 = dma.done [#allocation3], 416
    $region29: #{tpu_custom_call.1} parent=1 // pred_fallthru
      _
    %3021 = vsyncpa [#allocation3], 1

</llo_original>
